<compile_context>
chip_gen: v7x
topology: tpu7x:2x2x1
jax: 0.10.0
libtpu: 0.0.40
codegen_flags: <defaults>
</compile_context>

<pallas_src>
import functools

import numpy as np
import jax
import jax.numpy as jnp
from jax.experimental import pallas as pl
from jax.experimental.pallas import tpu as pltpu


def _total_loss_kernel(vs_ref, label_ref, q_ref, k_ref, neg_ref, s_ref, d_ref,
                       act_ref, o_ref, *, temperature, sigma, e_theta, e_alpha,
                       e_g, theta):
    f32 = jnp.float32

    # ----------------- ActionLoss: BCE(video_scores, label / label.sum(1)) -------
    p = vs_ref[...].astype(f32)                              # (Bc, C)
    y = label_ref[...].astype(f32)
    y = y / jnp.sum(y, axis=1, keepdims=True)
    log_p = jnp.maximum(jnp.log(p), -100.0)                  # PyTorch BCE clamp
    log_1mp = jnp.maximum(jnp.log(1.0 - p), -100.0)
    loss_cls = jnp.mean(-(y * log_p + (1.0 - y) * log_1mp))

    # ----------------- SniCoLoss: both InfoNCE branches fused --------------------
    eps2 = 1e-24                                             # (F.normalize eps)^2
    q_src = q_ref[...].astype(f32)                           # (2N, TC, C) = [HA; HB]
    k_src = k_ref[...].astype(f32)                           # (2N, TC, C) = [EA; EB]
    neg = neg_ref[...].astype(f32)                           # (2N, K,  C) = [EB; EA]
    n_branch = q_src.shape[0] // 2                           # static python int

    q = jnp.mean(q_src, axis=1)                              # (2N, C) temporal mean
    k = jnp.mean(k_src, axis=1)                              # (2N, C)
    qn = q * jax.lax.rsqrt(jnp.maximum(jnp.sum(q * q, axis=1, keepdims=True), eps2))
    kn = k * jax.lax.rsqrt(jnp.maximum(jnp.sum(k * k, axis=1, keepdims=True), eps2))
    negn = neg * jax.lax.rsqrt(
        jnp.maximum(jnp.sum(neg * neg, axis=2, keepdims=True), eps2))

    inv_t = 1.0 / temperature
    l_pos = jnp.sum(qn * kn, axis=1, keepdims=True) * inv_t          # (2N, 1)
    # q-dim == 1 contraction -> VPU broadcast-multiply + lane reduce (no MXU).
    l_neg = jnp.sum(qn[:, None, :] * negn, axis=2) * inv_t           # (2N, K)
    # CrossEntropy with label 0 == mean_n( logsumexp(logits_n) - logits_n[0] )
    m = jnp.maximum(jnp.max(l_neg, axis=1, keepdims=True), l_pos)
    lse = jnp.log(jnp.exp(l_pos - m)
                  + jnp.sum(jnp.exp(l_neg - m), axis=1, keepdims=True)) + m
    # mean over first N rows + mean over second N rows == sum over 2N rows / N
    loss_snico = jnp.sum(lse - l_pos) / float(n_branch)

    # ----------------- RelationLoss_v2 (stacked lane-dense rows) -----------------
    s = s_ref[...].astype(f32)                               # (1, ns*M)  -> BCE vs 1
    d = d_ref[...].astype(f32)                               # (1, nd*M)  -> BCE vs 0
    loss_relation = (jnp.mean(-jnp.maximum(jnp.log(s), -100.0))
                     + jnp.mean(-jnp.maximum(jnp.log(1.0 - d), -100.0)))

    # ----------------- ActELoss_v3 ------------------------------------------------
    # act_ref layout (33, B, T):
    #   [0..10]  actioness_4[:, j:j+T]   (padded actioness, 11 shifted views)
    #   [11..21] actioness_3[:, j:j+T]   (padded actioness_2, 11 shifted views)
    #   [22..32] actioness[(11*b + j) % B, :]  (row-permuted actioness for max_w)
    a0 = act_ref[6].astype(f32)                              # actioness     (B, T)
    a2 = act_ref[17].astype(f32)                             # actioness_2   (B, T)
    b_act = a0.shape[0]

    # max_w[b, i] = max_{j'} ( actioness[(11*b + j') % B, i] - actioness_4[b, i + j'] )
    max_w = None
    for j in range(11):
        diff = act_ref[22 + j].astype(f32) - act_ref[j].astype(f32)
        max_w = diff if max_w is None else jnp.maximum(max_w, diff)
    g = e_g * max_w * max_w                                  # (B, T)

    inv_two_sigma_sq = 1.0 / (2.0 * sigma * sigma)
    acc_bt = jnp.zeros_like(a0)                              # (B, T) accumulator
    for j in range(11):                                      # static unroll over window
        a4s = act_ref[j].astype(f32)                         # actioness_4[:, i + j]
        a3s = act_ref[11 + j].astype(f32)                    # actioness_3[:, i + j]
        dlt = a0 - a4s
        norm_sq = jnp.sum(dlt * dlt, axis=0, keepdims=True)  # (1, T) ||.||^2 over batch
        w = jnp.exp(-(jnp.maximum(norm_sq - g, 0.0) + g) * inv_two_sigma_sq)  # (B, T)
        acc_bt = acc_bt + w * jnp.abs(a2 - a3s)              # VPU only, no reductions
    # sum_i sum_j mean_b(...) == sum over (B, T) accumulator / B  (exact reassociation)
    loss1 = jnp.sum(acc_bt) / float(b_act)
    dd = a0 - a2
    loss2 = e_theta * jnp.mean(jnp.sum(dd * dd, axis=1, keepdims=True))
    loss_act = (loss1 + loss2) * e_alpha

    # ----------------- weighted total + single unmasked lane-row store -----------
    loss_total = loss_cls + 0.01 * loss_snico + loss_act + theta * loss_relation
    lane = jax.lax.broadcasted_iota(jnp.int32, o_ref.shape, 1)
    row = jnp.where(lane == 0, loss_cls,
          jnp.where(lane == 1, loss_snico,
          jnp.where(lane == 2, loss_act,
          jnp.where(lane == 3, loss_relation,
          jnp.where(lane == 4, loss_total, 0.0)))))
    o_ref[...] = row.astype(o_ref.dtype)


def _torch_style_pad(a):
    """actioness_3 / actioness_4 construction from ActELoss_v3, replicated exactly
    (including the batch interleave produced by `.repeat(1, 6).reshape(B, 6)`)."""
    B, T = a.shape
    b_idx = np.arange(B)[:, None]
    left_idx = (6 * b_idx + np.arange(6)[None, :]) % B           # cols 0..5
    right_idx = (6 * b_idx + (np.arange(5)[None, :] + 1)) % B    # cols T+6..T+10
    left = a[left_idx, 0]                                        # (B, 6)
    right = a[right_idx, T - 1]                                  # (B, 5)
    return jnp.concatenate([left, a, right], axis=1)             # (B, T + 11)


def total_loss_19(video_scores, label, contrast_pairs, re_s_scores, re_d_scores,
                  actioness, actioness_2, *, cfg):
    f32 = jnp.float32
    HA = contrast_pairs["HA"].astype(f32)
    EA = contrast_pairs["EA"].astype(f32)
    HB = contrast_pairs["HB"].astype(f32)
    EB = contrast_pairs["EB"].astype(f32)

    # SniCo: fuse the two NCE branches by stacking along the batch axis on the host.
    q_src = jnp.concatenate([HA, HB], axis=0)                # (2N, TC, C)
    k_src = jnp.concatenate([EA, EB], axis=0)                # (2N, TC, C)
    neg_src = jnp.concatenate([EB, EA], axis=0)              # (2N, K,  C)

    # Relation: stack lists into lane-dense rows (exact because every entry has the
    # same shape in this module's usage).
    re_s = jnp.concatenate([jnp.reshape(s, (1, -1)) for s in re_s_scores],
                           axis=1).astype(f32)               # (1, ns*M)
    re_d = jnp.concatenate([jnp.reshape(d, (1, -1)) for d in re_d_scores],
                           axis=1).astype(f32)               # (1, nd*M)

    # ActE glue: torch-exact edge pads, then pre-shifted / row-permuted slabs stacked
    # into ONE (33, B, T) input (static first-axis indexing in-kernel, no rotates).
    act0 = actioness.astype(f32)
    act2 = actioness_2.astype(f32)
    B_act, T_act = act0.shape
    a0p = _torch_style_pad(act0)                             # actioness_4 (B, T+11)
    a2p = _torch_style_pad(act2)                             # actioness_3 (B, T+11)
    a0_sh = jnp.stack([a0p[:, j:j + T_act] for j in range(11)], axis=0)   # (11,B,T)
    a2_sh = jnp.stack([a2p[:, j:j + T_act] for j in range(11)], axis=0)   # (11,B,T)
    perm_idx = (11 * np.arange(B_act)[None, :] + np.arange(11)[:, None]) % B_act
    a0_perm = act0[perm_idx]                                               # (11,B,T)
    act_stack = jnp.concatenate([a0_sh, a2_sh, a0_perm], axis=0)           # (33,B,T)

    inputs = [video_scores.astype(f32), label.astype(f32), q_src, k_src,
              neg_src, re_s, re_d, act_stack]

    def full_spec(x):
        rank = x.ndim
        return pl.BlockSpec(x.shape, lambda i, _r=rank: (0,) * _r)

    kernel = functools.partial(
        _total_loss_kernel, temperature=0.07,
        sigma=float(cfg["SIGMA"]), e_theta=float(cfg["E_THETA"]),
        e_alpha=float(cfg["E_ALPHA"]), e_g=float(cfg["E_G"]),
        theta=float(cfg["THETA"]))

    # Advisory cost estimate + a VMEM limit sized to the real footprint.
    in_bytes = sum(int(x.size) * x.dtype.itemsize for x in inputs)
    n2, _, c_dim = q_src.shape
    k_dim = neg_src.shape[1]
    flops = int(10 * video_scores.size + 40 * (3 * n2 * k_dim * c_dim)
                + 230 * B_act * T_act + 6 * (int(re_s.size) + int(re_d.size)))
    transcendentals = int(11 * B_act * T_act + n2 * (k_dim + 4)
                          + 2 * int(video_scores.size)
                          + int(re_s.size) + int(re_d.size))
    cost = pl.CostEstimate(flops=flops, transcendentals=transcendentals,
                           bytes_accessed=in_bytes + 512)
    vmem_limit = int(min(64 * 1024 * 1024, max(4 * 1024 * 1024, 6 * in_bytes)))

    out = pl.pallas_call(
        kernel,
        out_shape=jax.ShapeDtypeStruct((1, 128), jnp.float32),
        grid=(1,),
        in_specs=[full_spec(x) for x in inputs],
        out_specs=pl.BlockSpec((1, 128), lambda i: (0, 0)),
        compiler_params=pltpu.CompilerParams(
            dimension_semantics=("arbitrary",),
            vmem_limit_bytes=vmem_limit),
        cost_estimate=cost,
    )(*inputs)

    loss_cls = out[0, 0]
    loss_snico = out[0, 1]
    loss_act = out[0, 2]
    loss_relation = out[0, 3]
    loss_total = out[0, 4]
    loss_dict = {
        "Loss/Action": loss_cls,
        "Loss/SniCo": loss_snico,
        "Loss/ActE": loss_act,
        "Loss/Relation": loss_relation,
        "Loss/Total": loss_total,
    }
    return loss_total, loss_dict


if __name__ == "__main__":
    key = jax.random.PRNGKey(0)
    ks = jax.random.split(key, 11)

    # small, module-consistent shapes
    B, C_CLS = 2, 4          # video-level classification
    N, TC, C = 2, 8, 32      # contrast pairs (N clips, 8 snippets, 32-dim features)
    T_ACT = 16               # actioness temporal length (torch hard-codes 750)
    M = 3                    # relation pairs per list entry

    video_scores = jax.nn.sigmoid(jax.random.normal(ks[0], (B, C_CLS), jnp.float32))
    label = jnp.array([[1.0, 0.0, 1.0, 0.0],
                       [0.0, 1.0, 0.0, 1.0]], jnp.float32)

    contrast_pairs = {
        "HA": jax.random.normal(ks[1], (N, TC, C), jnp.float32),
        "EA": jax.random.normal(ks[2], (N, TC, C), jnp.float32),
        "HB": jax.random.normal(ks[3], (N, TC, C), jnp.float32),
        "EB": jax.random.normal(ks[4], (N, TC, C), jnp.float32),
    }

    re_s_scores = [jax.nn.sigmoid(jax.random.normal(ks[5], (M, 1), jnp.float32)),
                   jax.nn.sigmoid(jax.random.normal(ks[6], (M, 1), jnp.float32))]
    re_d_scores = [jax.nn.sigmoid(jax.random.normal(ks[7], (M, 1), jnp.float32)),
                   jax.nn.sigmoid(jax.random.normal(ks[8], (M, 1), jnp.float32))]

    actioness = jax.nn.sigmoid(jax.random.normal(ks[9], (B, T_ACT), jnp.float32))
    actioness_2 = jax.nn.sigmoid(jax.random.normal(ks[10], (B, T_ACT), jnp.float32))

    cfg = {"SIGMA": 1.0, "E_THETA": 0.1, "E_ALPHA": 0.01, "E_G": 0.5, "THETA": 0.5}

    loss_total, loss_dict = total_loss_19(
        video_scores, label, contrast_pairs, re_s_scores, re_d_scores,
        actioness, actioness_2, cfg=cfg)

    jax.block_until_ready(loss_total)
    for v in loss_dict.values():
        jax.block_until_ready(v)
    print("KERNEL_OK")
</pallas_src>

<mosaic_0001>
module attributes {stable_mosaic.version = 11 : i64} {
  func.func @_total_loss_kernel(%arg0: i32, %arg1: memref<2x4xf32, #tpu.memory_space<vmem>>, %arg2: memref<2x4xf32, #tpu.memory_space<vmem>>, %arg3: memref<4x8x32xf32, #tpu.memory_space<vmem>>, %arg4: memref<4x8x32xf32, #tpu.memory_space<vmem>>, %arg5: memref<4x8x32xf32, #tpu.memory_space<vmem>>, %arg6: memref<1x6xf32, #tpu.memory_space<vmem>>, %arg7: memref<1x6xf32, #tpu.memory_space<vmem>>, %arg8: memref<33x2x16xf32, #tpu.memory_space<vmem>>, %arg9: memref<1x128xf32, #tpu.memory_space<vmem>>) attributes {dimension_semantics = [#tpu.dimension_semantics<arbitrary>], iteration_bounds = array<i64: 1>, scalar_prefetch = 0 : i64, scratch_operands = 0 : i64, tpu.core_type = #tpu.core_type<tc>, window_params = [{pipeline_mode = #tpu.pipeline_mode<synchronous>, transform_indices = @transform_0, window_bounds = array<i64: 2, 4>}, {pipeline_mode = #tpu.pipeline_mode<synchronous>, transform_indices = @transform_1, window_bounds = array<i64: 2, 4>}, {pipeline_mode = #tpu.pipeline_mode<synchronous>, transform_indices = @transform_2, window_bounds = array<i64: 4, 8, 32>}, {pipeline_mode = #tpu.pipeline_mode<synchronous>, transform_indices = @transform_3, window_bounds = array<i64: 4, 8, 32>}, {pipeline_mode = #tpu.pipeline_mode<synchronous>, transform_indices = @transform_4, window_bounds = array<i64: 4, 8, 32>}, {pipeline_mode = #tpu.pipeline_mode<synchronous>, transform_indices = @transform_5, window_bounds = array<i64: 1, 6>}, {pipeline_mode = #tpu.pipeline_mode<synchronous>, transform_indices = @transform_6, window_bounds = array<i64: 1, 6>}, {pipeline_mode = #tpu.pipeline_mode<synchronous>, transform_indices = @transform_7, window_bounds = array<i64: 33, 2, 16>}, {pipeline_mode = #tpu.pipeline_mode<synchronous>, transform_indices = @transform_8, window_bounds = array<i64: 1, 128>}]} {
    %c0 = arith.constant 0 : index
    %c0_0 = arith.constant 0 : index
    %0 = vector.load %arg1[%c0, %c0_0] : memref<2x4xf32, #tpu.memory_space<vmem>>, vector<2x4xf32>
    %c0_1 = arith.constant 0 : index
    %c0_2 = arith.constant 0 : index
    %1 = vector.load %arg2[%c0_1, %c0_2] : memref<2x4xf32, #tpu.memory_space<vmem>>, vector<2x4xf32>
    %cst = arith.constant dense<0.000000e+00> : vector<2xf32>
    %2 = vector.multi_reduction <add>, %1, %cst [1] : vector<2x4xf32> to vector<2xf32>
    %3 = vector.shape_cast %2 : vector<2xf32> to vector<2x1xf32>
    %4 = vector.broadcast %3 : vector<2x1xf32> to vector<2x4xf32>
    %5 = arith.divf %1, %4 : vector<2x4xf32>
    %6 = math.log %0 : vector<2x4xf32>
    %cst_3 = arith.constant -1.000000e+02 : f32
    %7 = vector.broadcast %cst_3 : f32 to vector<2x4xf32>
    %8 = arith.maximumf %6, %7 : vector<2x4xf32>
    %cst_4 = arith.constant 1.000000e+00 : f32
    %9 = vector.broadcast %cst_4 : f32 to vector<2x4xf32>
    %10 = arith.subf %9, %0 : vector<2x4xf32>
    %11 = math.log %10 : vector<2x4xf32>
    %cst_5 = arith.constant -1.000000e+02 : f32
    %12 = vector.broadcast %cst_5 : f32 to vector<2x4xf32>
    %13 = arith.maximumf %11, %12 : vector<2x4xf32>
    %14 = arith.mulf %5, %8 : vector<2x4xf32>
    %cst_6 = arith.constant 1.000000e+00 : f32
    %15 = vector.broadcast %cst_6 : f32 to vector<2x4xf32>
    %16 = arith.subf %15, %5 : vector<2x4xf32>
    %17 = arith.mulf %16, %13 : vector<2x4xf32>
    %18 = arith.addf %14, %17 : vector<2x4xf32>
    %cst_7 = arith.constant 0.000000e+00 : f32
    %19 = vector.broadcast %cst_7 : f32 to vector<2x4xf32>
    %20 = arith.subf %19, %18 : vector<2x4xf32>
    %21 = vector.shape_cast %20 : vector<2x4xf32> to vector<1x2x4xf32>
    %cst_8 = arith.constant dense<0.000000e+00> : vector<1xf32>
    %22 = vector.multi_reduction <add>, %21, %cst_8 [1, 2] : vector<1x2x4xf32> to vector<1xf32>
    %23 = vector.shape_cast %22 : vector<1xf32> to vector<1x1x1xf32>
    %24 = vector.extract %23[0, 0, 0] : f32 from vector<1x1x1xf32>
    %cst_9 = arith.constant 8.000000e+00 : f32
    %25 = arith.divf %24, %cst_9 : f32
    %c0_10 = arith.constant 0 : index
    %c0_11 = arith.constant 0 : index
    %c0_12 = arith.constant 0 : index
    %26 = vector.load %arg3[%c0_10, %c0_11, %c0_12] : memref<4x8x32xf32, #tpu.memory_space<vmem>>, vector<4x8x32xf32>
    %c0_13 = arith.constant 0 : index
    %c0_14 = arith.constant 0 : index
    %c0_15 = arith.constant 0 : index
    %27 = vector.load %arg4[%c0_13, %c0_14, %c0_15] : memref<4x8x32xf32, #tpu.memory_space<vmem>>, vector<4x8x32xf32>
    %c0_16 = arith.constant 0 : index
    %c0_17 = arith.constant 0 : index
    %c0_18 = arith.constant 0 : index
    %28 = vector.load %arg5[%c0_16, %c0_17, %c0_18] : memref<4x8x32xf32, #tpu.memory_space<vmem>>, vector<4x8x32xf32>
    %cst_19 = arith.constant dense<0.000000e+00> : vector<4x32xf32>
    %29 = vector.multi_reduction <add>, %26, %cst_19 [1] : vector<4x8x32xf32> to vector<4x32xf32>
    %cst_20 = arith.constant 8.000000e+00 : f32
    %30 = vector.broadcast %cst_20 : f32 to vector<4x32xf32>
    %31 = arith.divf %29, %30 : vector<4x32xf32>
    %cst_21 = arith.constant dense<0.000000e+00> : vector<4x32xf32>
    %32 = vector.multi_reduction <add>, %27, %cst_21 [1] : vector<4x8x32xf32> to vector<4x32xf32>
    %cst_22 = arith.constant 8.000000e+00 : f32
    %33 = vector.broadcast %cst_22 : f32 to vector<4x32xf32>
    %34 = arith.divf %32, %33 : vector<4x32xf32>
    %35 = arith.mulf %31, %31 : vector<4x32xf32>
    %cst_23 = arith.constant dense<0.000000e+00> : vector<4xf32>
    %36 = vector.multi_reduction <add>, %35, %cst_23 [1] : vector<4x32xf32> to vector<4xf32>
    %37 = vector.shape_cast %36 : vector<4xf32> to vector<4x1xf32>
    %cst_24 = arith.constant 1.000000e-24 : f32
    %38 = vector.broadcast %cst_24 : f32 to vector<4x1xf32>
    %39 = arith.maximumf %37, %38 : vector<4x1xf32>
    %40 = math.rsqrt %39 : vector<4x1xf32>
    %41 = vector.broadcast %40 : vector<4x1xf32> to vector<4x32xf32>
    %42 = arith.mulf %31, %41 : vector<4x32xf32>
    %43 = arith.mulf %34, %34 : vector<4x32xf32>
    %cst_25 = arith.constant dense<0.000000e+00> : vector<4xf32>
    %44 = vector.multi_reduction <add>, %43, %cst_25 [1] : vector<4x32xf32> to vector<4xf32>
    %45 = vector.shape_cast %44 : vector<4xf32> to vector<4x1xf32>
    %cst_26 = arith.constant 1.000000e-24 : f32
    %46 = vector.broadcast %cst_26 : f32 to vector<4x1xf32>
    %47 = arith.maximumf %45, %46 : vector<4x1xf32>
    %48 = math.rsqrt %47 : vector<4x1xf32>
    %49 = vector.broadcast %48 : vector<4x1xf32> to vector<4x32xf32>
    %50 = arith.mulf %34, %49 : vector<4x32xf32>
    %51 = arith.mulf %28, %28 : vector<4x8x32xf32>
    %cst_27 = arith.constant dense<0.000000e+00> : vector<4x8xf32>
    %52 = vector.multi_reduction <add>, %51, %cst_27 [2] : vector<4x8x32xf32> to vector<4x8xf32>
    %53 = vector.shape_cast %52 : vector<4x8xf32> to vector<4x8x1xf32>
    %cst_28 = arith.constant 1.000000e-24 : f32
    %54 = vector.broadcast %cst_28 : f32 to vector<4x8x1xf32>
    %55 = arith.maximumf %53, %54 : vector<4x8x1xf32>
    %56 = math.rsqrt %55 : vector<4x8x1xf32>
    %57 = vector.broadcast %56 : vector<4x8x1xf32> to vector<4x8x32xf32>
    %58 = arith.mulf %28, %57 : vector<4x8x32xf32>
    %59 = arith.mulf %42, %50 : vector<4x32xf32>
    %cst_29 = arith.constant dense<0.000000e+00> : vector<4xf32>
    %60 = vector.multi_reduction <add>, %59, %cst_29 [1] : vector<4x32xf32> to vector<4xf32>
    %61 = vector.shape_cast %60 : vector<4xf32> to vector<4x1xf32>
    %cst_30 = arith.constant 14.2857141 : f32
    %62 = vector.broadcast %cst_30 : f32 to vector<4x1xf32>
    %63 = arith.mulf %61, %62 : vector<4x1xf32>
    %64 = vector.shape_cast %42 : vector<4x32xf32> to vector<4x1x32xf32>
    %65 = vector.broadcast %64 : vector<4x1x32xf32> to vector<4x8x32xf32>
    %66 = arith.mulf %65, %58 : vector<4x8x32xf32>
    %cst_31 = arith.constant dense<0.000000e+00> : vector<4x8xf32>
    %67 = vector.multi_reduction <add>, %66, %cst_31 [2] : vector<4x8x32xf32> to vector<4x8xf32>
    %cst_32 = arith.constant 14.2857141 : f32
    %68 = vector.broadcast %cst_32 : f32 to vector<4x8xf32>
    %69 = arith.mulf %67, %68 : vector<4x8xf32>
    %cst_33 = arith.constant dense<0xFF800000> : vector<4xf32>
    %70 = vector.multi_reduction <maximumf>, %69, %cst_33 [1] : vector<4x8xf32> to vector<4xf32>
    %71 = vector.shape_cast %70 : vector<4xf32> to vector<4x1xf32>
    %72 = arith.maximumf %71, %63 : vector<4x1xf32>
    %73 = arith.subf %63, %72 : vector<4x1xf32>
    %74 = math.exp %73 : vector<4x1xf32>
    %75 = vector.broadcast %72 : vector<4x1xf32> to vector<4x8xf32>
    %76 = arith.subf %69, %75 : vector<4x8xf32>
    %77 = math.exp %76 : vector<4x8xf32>
    %cst_34 = arith.constant dense<0.000000e+00> : vector<4xf32>
    %78 = vector.multi_reduction <add>, %77, %cst_34 [1] : vector<4x8xf32> to vector<4xf32>
    %79 = vector.shape_cast %78 : vector<4xf32> to vector<4x1xf32>
    %80 = arith.addf %74, %79 : vector<4x1xf32>
    %81 = math.log %80 : vector<4x1xf32>
    %82 = arith.addf %81, %72 : vector<4x1xf32>
    %83 = arith.subf %82, %63 : vector<4x1xf32>
    %84 = vector.shape_cast %83 : vector<4x1xf32> to vector<1x4x1xf32>
    %cst_35 = arith.constant dense<0.000000e+00> : vector<1xf32>
    %85 = vector.multi_reduction <add>, %84, %cst_35 [1, 2] : vector<1x4x1xf32> to vector<1xf32>
    %86 = vector.shape_cast %85 : vector<1xf32> to vector<1x1x1xf32>
    %87 = vector.extract %86[0, 0, 0] : f32 from vector<1x1x1xf32>
    %cst_36 = arith.constant 2.000000e+00 : f32
    %88 = arith.divf %87, %cst_36 : f32
    %c0_37 = arith.constant 0 : index
    %c0_38 = arith.constant 0 : index
    %89 = vector.load %arg6[%c0_37, %c0_38] : memref<1x6xf32, #tpu.memory_space<vmem>>, vector<1x6xf32>
    %c0_39 = arith.constant 0 : index
    %c0_40 = arith.constant 0 : index
    %90 = vector.load %arg7[%c0_39, %c0_40] : memref<1x6xf32, #tpu.memory_space<vmem>>, vector<1x6xf32>
    %91 = math.log %89 : vector<1x6xf32>
    %cst_41 = arith.constant -1.000000e+02 : f32
    %92 = vector.broadcast %cst_41 : f32 to vector<1x6xf32>
    %93 = arith.maximumf %91, %92 : vector<1x6xf32>
    %cst_42 = arith.constant 0.000000e+00 : f32
    %94 = vector.broadcast %cst_42 : f32 to vector<1x6xf32>
    %95 = arith.subf %94, %93 : vector<1x6xf32>
    %96 = vector.shape_cast %95 : vector<1x6xf32> to vector<1x1x6xf32>
    %cst_43 = arith.constant dense<0.000000e+00> : vector<1xf32>
    %97 = vector.multi_reduction <add>, %96, %cst_43 [1, 2] : vector<1x1x6xf32> to vector<1xf32>
    %98 = vector.shape_cast %97 : vector<1xf32> to vector<1x1x1xf32>
    %99 = vector.extract %98[0, 0, 0] : f32 from vector<1x1x1xf32>
    %cst_44 = arith.constant 6.000000e+00 : f32
    %100 = arith.divf %99, %cst_44 : f32
    %cst_45 = arith.constant 1.000000e+00 : f32
    %101 = vector.broadcast %cst_45 : f32 to vector<1x6xf32>
    %102 = arith.subf %101, %90 : vector<1x6xf32>
    %103 = math.log %102 : vector<1x6xf32>
    %cst_46 = arith.constant -1.000000e+02 : f32
    %104 = vector.broadcast %cst_46 : f32 to vector<1x6xf32>
    %105 = arith.maximumf %103, %104 : vector<1x6xf32>
    %cst_47 = arith.constant 0.000000e+00 : f32
    %106 = vector.broadcast %cst_47 : f32 to vector<1x6xf32>
    %107 = arith.subf %106, %105 : vector<1x6xf32>
    %108 = vector.shape_cast %107 : vector<1x6xf32> to vector<1x1x6xf32>
    %cst_48 = arith.constant dense<0.000000e+00> : vector<1xf32>
    %109 = vector.multi_reduction <add>, %108, %cst_48 [1, 2] : vector<1x1x6xf32> to vector<1xf32>
    %110 = vector.shape_cast %109 : vector<1xf32> to vector<1x1x1xf32>
    %111 = vector.extract %110[0, 0, 0] : f32 from vector<1x1x1xf32>
    %cst_49 = arith.constant 6.000000e+00 : f32
    %112 = arith.divf %111, %cst_49 : f32
    %113 = arith.addf %100, %112 : f32
    %c6 = arith.constant 6 : index
    %c0_50 = arith.constant 0 : index
    %c0_51 = arith.constant 0 : index
    %114 = vector.load %arg8[%c6, %c0_50, %c0_51] : memref<33x2x16xf32, #tpu.memory_space<vmem>>, vector<1x2x16xf32>
    %115 = vector.shape_cast %114 : vector<1x2x16xf32> to vector<2x16xf32>
    %c17 = arith.constant 17 : index
    %c0_52 = arith.constant 0 : index
    %c0_53 = arith.constant 0 : index
    %116 = vector.load %arg8[%c17, %c0_52, %c0_53] : memref<33x2x16xf32, #tpu.memory_space<vmem>>, vector<1x2x16xf32>
    %117 = vector.shape_cast %116 : vector<1x2x16xf32> to vector<2x16xf32>
    %c22 = arith.constant 22 : index
    %c0_54 = arith.constant 0 : index
    %c0_55 = arith.constant 0 : index
    %118 = vector.load %arg8[%c22, %c0_54, %c0_55] : memref<33x2x16xf32, #tpu.memory_space<vmem>>, vector<1x2x16xf32>
    %119 = vector.shape_cast %118 : vector<1x2x16xf32> to vector<2x16xf32>
    %c0_56 = arith.constant 0 : index
    %c0_57 = arith.constant 0 : index
    %c0_58 = arith.constant 0 : index
    %120 = vector.load %arg8[%c0_56, %c0_57, %c0_58] : memref<33x2x16xf32, #tpu.memory_space<vmem>>, vector<1x2x16xf32>
    %121 = vector.shape_cast %120 : vector<1x2x16xf32> to vector<2x16xf32>
    %122 = arith.subf %119, %121 : vector<2x16xf32>
    %c23 = arith.constant 23 : index
    %c0_59 = arith.constant 0 : index
    %c0_60 = arith.constant 0 : index
    %123 = vector.load %arg8[%c23, %c0_59, %c0_60] : memref<33x2x16xf32, #tpu.memory_space<vmem>>, vector<1x2x16xf32>
    %124 = vector.shape_cast %123 : vector<1x2x16xf32> to vector<2x16xf32>
    %c1 = arith.constant 1 : index
    %c0_61 = arith.constant 0 : index
    %c0_62 = arith.constant 0 : index
    %125 = vector.load %arg8[%c1, %c0_61, %c0_62] : memref<33x2x16xf32, #tpu.memory_space<vmem>>, vector<1x2x16xf32>
    %126 = vector.shape_cast %125 : vector<1x2x16xf32> to vector<2x16xf32>
    %127 = arith.subf %124, %126 : vector<2x16xf32>
    %128 = arith.maximumf %122, %127 : vector<2x16xf32>
    %c24 = arith.constant 24 : index
    %c0_63 = arith.constant 0 : index
    %c0_64 = arith.constant 0 : index
    %129 = vector.load %arg8[%c24, %c0_63, %c0_64] : memref<33x2x16xf32, #tpu.memory_space<vmem>>, vector<1x2x16xf32>
    %130 = vector.shape_cast %129 : vector<1x2x16xf32> to vector<2x16xf32>
    %c2 = arith.constant 2 : index
    %c0_65 = arith.constant 0 : index
    %c0_66 = arith.constant 0 : index
    %131 = vector.load %arg8[%c2, %c0_65, %c0_66] : memref<33x2x16xf32, #tpu.memory_space<vmem>>, vector<1x2x16xf32>
    %132 = vector.shape_cast %131 : vector<1x2x16xf32> to vector<2x16xf32>
    %133 = arith.subf %130, %132 : vector<2x16xf32>
    %134 = arith.maximumf %128, %133 : vector<2x16xf32>
    %c25 = arith.constant 25 : index
    %c0_67 = arith.constant 0 : index
    %c0_68 = arith.constant 0 : index
    %135 = vector.load %arg8[%c25, %c0_67, %c0_68] : memref<33x2x16xf32, #tpu.memory_space<vmem>>, vector<1x2x16xf32>
    %136 = vector.shape_cast %135 : vector<1x2x16xf32> to vector<2x16xf32>
    %c3 = arith.constant 3 : index
    %c0_69 = arith.constant 0 : index
    %c0_70 = arith.constant 0 : index
    %137 = vector.load %arg8[%c3, %c0_69, %c0_70] : memref<33x2x16xf32, #tpu.memory_space<vmem>>, vector<1x2x16xf32>
    %138 = vector.shape_cast %137 : vector<1x2x16xf32> to vector<2x16xf32>
    %139 = arith.subf %136, %138 : vector<2x16xf32>
    %140 = arith.maximumf %134, %139 : vector<2x16xf32>
    %c26 = arith.constant 26 : index
    %c0_71 = arith.constant 0 : index
    %c0_72 = arith.constant 0 : index
    %141 = vector.load %arg8[%c26, %c0_71, %c0_72] : memref<33x2x16xf32, #tpu.memory_space<vmem>>, vector<1x2x16xf32>
    %142 = vector.shape_cast %141 : vector<1x2x16xf32> to vector<2x16xf32>
    %c4 = arith.constant 4 : index
    %c0_73 = arith.constant 0 : index
    %c0_74 = arith.constant 0 : index
    %143 = vector.load %arg8[%c4, %c0_73, %c0_74] : memref<33x2x16xf32, #tpu.memory_space<vmem>>, vector<1x2x16xf32>
    %144 = vector.shape_cast %143 : vector<1x2x16xf32> to vector<2x16xf32>
    %145 = arith.subf %142, %144 : vector<2x16xf32>
    %146 = arith.maximumf %140, %145 : vector<2x16xf32>
    %c27 = arith.constant 27 : index
    %c0_75 = arith.constant 0 : index
    %c0_76 = arith.constant 0 : index
    %147 = vector.load %arg8[%c27, %c0_75, %c0_76] : memref<33x2x16xf32, #tpu.memory_space<vmem>>, vector<1x2x16xf32>
    %148 = vector.shape_cast %147 : vector<1x2x16xf32> to vector<2x16xf32>
    %c5 = arith.constant 5 : index
    %c0_77 = arith.constant 0 : index
    %c0_78 = arith.constant 0 : index
    %149 = vector.load %arg8[%c5, %c0_77, %c0_78] : memref<33x2x16xf32, #tpu.memory_space<vmem>>, vector<1x2x16xf32>
    %150 = vector.shape_cast %149 : vector<1x2x16xf32> to vector<2x16xf32>
    %151 = arith.subf %148, %150 : vector<2x16xf32>
    %152 = arith.maximumf %146, %151 : vector<2x16xf32>
    %c28 = arith.constant 28 : index
    %c0_79 = arith.constant 0 : index
    %c0_80 = arith.constant 0 : index
    %153 = vector.load %arg8[%c28, %c0_79, %c0_80] : memref<33x2x16xf32, #tpu.memory_space<vmem>>, vector<1x2x16xf32>
    %154 = vector.shape_cast %153 : vector<1x2x16xf32> to vector<2x16xf32>
    %c6_81 = arith.constant 6 : index
    %c0_82 = arith.constant 0 : index
    %c0_83 = arith.constant 0 : index
    %155 = vector.load %arg8[%c6_81, %c0_82, %c0_83] : memref<33x2x16xf32, #tpu.memory_space<vmem>>, vector<1x2x16xf32>
    %156 = vector.shape_cast %155 : vector<1x2x16xf32> to vector<2x16xf32>
    %157 = arith.subf %154, %156 : vector<2x16xf32>
    %158 = arith.maximumf %152, %157 : vector<2x16xf32>
    %c29 = arith.constant 29 : index
    %c0_84 = arith.constant 0 : index
    %c0_85 = arith.constant 0 : index
    %159 = vector.load %arg8[%c29, %c0_84, %c0_85] : memref<33x2x16xf32, #tpu.memory_space<vmem>>, vector<1x2x16xf32>
    %160 = vector.shape_cast %159 : vector<1x2x16xf32> to vector<2x16xf32>
    %c7 = arith.constant 7 : index
    %c0_86 = arith.constant 0 : index
    %c0_87 = arith.constant 0 : index
    %161 = vector.load %arg8[%c7, %c0_86, %c0_87] : memref<33x2x16xf32, #tpu.memory_space<vmem>>, vector<1x2x16xf32>
    %162 = vector.shape_cast %161 : vector<1x2x16xf32> to vector<2x16xf32>
    %163 = arith.subf %160, %162 : vector<2x16xf32>
    %164 = arith.maximumf %158, %163 : vector<2x16xf32>
    %c30 = arith.constant 30 : index
    %c0_88 = arith.constant 0 : index
    %c0_89 = arith.constant 0 : index
    %165 = vector.load %arg8[%c30, %c0_88, %c0_89] : memref<33x2x16xf32, #tpu.memory_space<vmem>>, vector<1x2x16xf32>
    %166 = vector.shape_cast %165 : vector<1x2x16xf32> to vector<2x16xf32>
    %c8 = arith.constant 8 : index
    %c0_90 = arith.constant 0 : index
    %c0_91 = arith.constant 0 : index
    %167 = vector.load %arg8[%c8, %c0_90, %c0_91] : memref<33x2x16xf32, #tpu.memory_space<vmem>>, vector<1x2x16xf32>
    %168 = vector.shape_cast %167 : vector<1x2x16xf32> to vector<2x16xf32>
    %169 = arith.subf %166, %168 : vector<2x16xf32>
    %170 = arith.maximumf %164, %169 : vector<2x16xf32>
    %c31 = arith.constant 31 : index
    %c0_92 = arith.constant 0 : index
    %c0_93 = arith.constant 0 : index
    %171 = vector.load %arg8[%c31, %c0_92, %c0_93] : memref<33x2x16xf32, #tpu.memory_space<vmem>>, vector<1x2x16xf32>
    %172 = vector.shape_cast %171 : vector<1x2x16xf32> to vector<2x16xf32>
    %c9 = arith.constant 9 : index
    %c0_94 = arith.constant 0 : index
    %c0_95 = arith.constant 0 : index
    %173 = vector.load %arg8[%c9, %c0_94, %c0_95] : memref<33x2x16xf32, #tpu.memory_space<vmem>>, vector<1x2x16xf32>
    %174 = vector.shape_cast %173 : vector<1x2x16xf32> to vector<2x16xf32>
    %175 = arith.subf %172, %174 : vector<2x16xf32>
    %176 = arith.maximumf %170, %175 : vector<2x16xf32>
    %c32 = arith.constant 32 : index
    %c0_96 = arith.constant 0 : index
    %c0_97 = arith.constant 0 : index
    %177 = vector.load %arg8[%c32, %c0_96, %c0_97] : memref<33x2x16xf32, #tpu.memory_space<vmem>>, vector<1x2x16xf32>
    %178 = vector.shape_cast %177 : vector<1x2x16xf32> to vector<2x16xf32>
    %c10 = arith.constant 10 : index
    %c0_98 = arith.constant 0 : index
    %c0_99 = arith.constant 0 : index
    %179 = vector.load %arg8[%c10, %c0_98, %c0_99] : memref<33x2x16xf32, #tpu.memory_space<vmem>>, vector<1x2x16xf32>
    %180 = vector.shape_cast %179 : vector<1x2x16xf32> to vector<2x16xf32>
    %181 = arith.subf %178, %180 : vector<2x16xf32>
    %182 = arith.maximumf %176, %181 : vector<2x16xf32>
    %cst_100 = arith.constant 5.000000e-01 : f32
    %183 = vector.broadcast %cst_100 : f32 to vector<2x16xf32>
    %184 = arith.mulf %183, %182 : vector<2x16xf32>
    %185 = arith.mulf %184, %182 : vector<2x16xf32>
    %cst_101 = arith.constant 0.000000e+00 : f32
    %186 = vector.broadcast %cst_101 : f32 to vector<2x16xf32>
    %c0_102 = arith.constant 0 : index
    %c0_103 = arith.constant 0 : index
    %c0_104 = arith.constant 0 : index
    %187 = vector.load %arg8[%c0_102, %c0_103, %c0_104] : memref<33x2x16xf32, #tpu.memory_space<vmem>>, vector<1x2x16xf32>
    %188 = vector.shape_cast %187 : vector<1x2x16xf32> to vector<2x16xf32>
    %c11 = arith.constant 11 : index
    %c0_105 = arith.constant 0 : index
    %c0_106 = arith.constant 0 : index
    %189 = vector.load %arg8[%c11, %c0_105, %c0_106] : memref<33x2x16xf32, #tpu.memory_space<vmem>>, vector<1x2x16xf32>
    %190 = vector.shape_cast %189 : vector<1x2x16xf32> to vector<2x16xf32>
    %191 = arith.subf %115, %188 : vector<2x16xf32>
    %192 = arith.mulf %191, %191 : vector<2x16xf32>
    %cst_107 = arith.constant dense<0.000000e+00> : vector<16xf32>
    %193 = vector.multi_reduction <add>, %192, %cst_107 [0] : vector<2x16xf32> to vector<16xf32>
    %194 = vector.shape_cast %193 : vector<16xf32> to vector<1x16xf32>
    %195 = vector.broadcast %194 : vector<1x16xf32> to vector<2x16xf32>
    %196 = arith.subf %195, %185 : vector<2x16xf32>
    %cst_108 = arith.constant 0.000000e+00 : f32
    %197 = vector.broadcast %cst_108 : f32 to vector<2x16xf32>
    %198 = arith.maximumf %196, %197 : vector<2x16xf32>
    %199 = arith.addf %198, %185 : vector<2x16xf32>
    %cst_109 = arith.constant 0.000000e+00 : f32
    %200 = vector.broadcast %cst_109 : f32 to vector<2x16xf32>
    %201 = arith.subf %200, %199 : vector<2x16xf32>
    %cst_110 = arith.constant 5.000000e-01 : f32
    %202 = vector.broadcast %cst_110 : f32 to vector<2x16xf32>
    %203 = arith.mulf %201, %202 : vector<2x16xf32>
    %204 = math.exp %203 : vector<2x16xf32>
    %205 = arith.subf %117, %190 : vector<2x16xf32>
    %206 = math.absf %205 : vector<2x16xf32>
    %207 = arith.mulf %204, %206 : vector<2x16xf32>
    %208 = arith.addf %186, %207 : vector<2x16xf32>
    %c1_111 = arith.constant 1 : index
    %c0_112 = arith.constant 0 : index
    %c0_113 = arith.constant 0 : index
    %209 = vector.load %arg8[%c1_111, %c0_112, %c0_113] : memref<33x2x16xf32, #tpu.memory_space<vmem>>, vector<1x2x16xf32>
    %210 = vector.shape_cast %209 : vector<1x2x16xf32> to vector<2x16xf32>
    %c12 = arith.constant 12 : index
    %c0_114 = arith.constant 0 : index
    %c0_115 = arith.constant 0 : index
    %211 = vector.load %arg8[%c12, %c0_114, %c0_115] : memref<33x2x16xf32, #tpu.memory_space<vmem>>, vector<1x2x16xf32>
    %212 = vector.shape_cast %211 : vector<1x2x16xf32> to vector<2x16xf32>
    %213 = arith.subf %115, %210 : vector<2x16xf32>
    %214 = arith.mulf %213, %213 : vector<2x16xf32>
    %cst_116 = arith.constant dense<0.000000e+00> : vector<16xf32>
    %215 = vector.multi_reduction <add>, %214, %cst_116 [0] : vector<2x16xf32> to vector<16xf32>
    %216 = vector.shape_cast %215 : vector<16xf32> to vector<1x16xf32>
    %217 = vector.broadcast %216 : vector<1x16xf32> to vector<2x16xf32>
    %218 = arith.subf %217, %185 : vector<2x16xf32>
    %cst_117 = arith.constant 0.000000e+00 : f32
    %219 = vector.broadcast %cst_117 : f32 to vector<2x16xf32>
    %220 = arith.maximumf %218, %219 : vector<2x16xf32>
    %221 = arith.addf %220, %185 : vector<2x16xf32>
    %cst_118 = arith.constant 0.000000e+00 : f32
    %222 = vector.broadcast %cst_118 : f32 to vector<2x16xf32>
    %223 = arith.subf %222, %221 : vector<2x16xf32>
    %cst_119 = arith.constant 5.000000e-01 : f32
    %224 = vector.broadcast %cst_119 : f32 to vector<2x16xf32>
    %225 = arith.mulf %223, %224 : vector<2x16xf32>
    %226 = math.exp %225 : vector<2x16xf32>
    %227 = arith.subf %117, %212 : vector<2x16xf32>
    %228 = math.absf %227 : vector<2x16xf32>
    %229 = arith.mulf %226, %228 : vector<2x16xf32>
    %230 = arith.addf %208, %229 : vector<2x16xf32>
    %c2_120 = arith.constant 2 : index
    %c0_121 = arith.constant 0 : index
    %c0_122 = arith.constant 0 : index
    %231 = vector.load %arg8[%c2_120, %c0_121, %c0_122] : memref<33x2x16xf32, #tpu.memory_space<vmem>>, vector<1x2x16xf32>
    %232 = vector.shape_cast %231 : vector<1x2x16xf32> to vector<2x16xf32>
    %c13 = arith.constant 13 : index
    %c0_123 = arith.constant 0 : index
    %c0_124 = arith.constant 0 : index
    %233 = vector.load %arg8[%c13, %c0_123, %c0_124] : memref<33x2x16xf32, #tpu.memory_space<vmem>>, vector<1x2x16xf32>
    %234 = vector.shape_cast %233 : vector<1x2x16xf32> to vector<2x16xf32>
    %235 = arith.subf %115, %232 : vector<2x16xf32>
    %236 = arith.mulf %235, %235 : vector<2x16xf32>
    %cst_125 = arith.constant dense<0.000000e+00> : vector<16xf32>
    %237 = vector.multi_reduction <add>, %236, %cst_125 [0] : vector<2x16xf32> to vector<16xf32>
    %238 = vector.shape_cast %237 : vector<16xf32> to vector<1x16xf32>
    %239 = vector.broadcast %238 : vector<1x16xf32> to vector<2x16xf32>
    %240 = arith.subf %239, %185 : vector<2x16xf32>
    %cst_126 = arith.constant 0.000000e+00 : f32
    %241 = vector.broadcast %cst_126 : f32 to vector<2x16xf32>
    %242 = arith.maximumf %240, %241 : vector<2x16xf32>
    %243 = arith.addf %242, %185 : vector<2x16xf32>
    %cst_127 = arith.constant 0.000000e+00 : f32
    %244 = vector.broadcast %cst_127 : f32 to vector<2x16xf32>
    %245 = arith.subf %244, %243 : vector<2x16xf32>
    %cst_128 = arith.constant 5.000000e-01 : f32
    %246 = vector.broadcast %cst_128 : f32 to vector<2x16xf32>
    %247 = arith.mulf %245, %246 : vector<2x16xf32>
    %248 = math.exp %247 : vector<2x16xf32>
    %249 = arith.subf %117, %234 : vector<2x16xf32>
    %250 = math.absf %249 : vector<2x16xf32>
    %251 = arith.mulf %248, %250 : vector<2x16xf32>
    %252 = arith.addf %230, %251 : vector<2x16xf32>
    %c3_129 = arith.constant 3 : index
    %c0_130 = arith.constant 0 : index
    %c0_131 = arith.constant 0 : index
    %253 = vector.load %arg8[%c3_129, %c0_130, %c0_131] : memref<33x2x16xf32, #tpu.memory_space<vmem>>, vector<1x2x16xf32>
    %254 = vector.shape_cast %253 : vector<1x2x16xf32> to vector<2x16xf32>
    %c14 = arith.constant 14 : index
    %c0_132 = arith.constant 0 : index
    %c0_133 = arith.constant 0 : index
    %255 = vector.load %arg8[%c14, %c0_132, %c0_133] : memref<33x2x16xf32, #tpu.memory_space<vmem>>, vector<1x2x16xf32>
    %256 = vector.shape_cast %255 : vector<1x2x16xf32> to vector<2x16xf32>
    %257 = arith.subf %115, %254 : vector<2x16xf32>
    %258 = arith.mulf %257, %257 : vector<2x16xf32>
    %cst_134 = arith.constant dense<0.000000e+00> : vector<16xf32>
    %259 = vector.multi_reduction <add>, %258, %cst_134 [0] : vector<2x16xf32> to vector<16xf32>
    %260 = vector.shape_cast %259 : vector<16xf32> to vector<1x16xf32>
    %261 = vector.broadcast %260 : vector<1x16xf32> to vector<2x16xf32>
    %262 = arith.subf %261, %185 : vector<2x16xf32>
    %cst_135 = arith.constant 0.000000e+00 : f32
    %263 = vector.broadcast %cst_135 : f32 to vector<2x16xf32>
    %264 = arith.maximumf %262, %263 : vector<2x16xf32>
    %265 = arith.addf %264, %185 : vector<2x16xf32>
    %cst_136 = arith.constant 0.000000e+00 : f32
    %266 = vector.broadcast %cst_136 : f32 to vector<2x16xf32>
    %267 = arith.subf %266, %265 : vector<2x16xf32>
    %cst_137 = arith.constant 5.000000e-01 : f32
    %268 = vector.broadcast %cst_137 : f32 to vector<2x16xf32>
    %269 = arith.mulf %267, %268 : vector<2x16xf32>
    %270 = math.exp %269 : vector<2x16xf32>
    %271 = arith.subf %117, %256 : vector<2x16xf32>
    %272 = math.absf %271 : vector<2x16xf32>
    %273 = arith.mulf %270, %272 : vector<2x16xf32>
    %274 = arith.addf %252, %273 : vector<2x16xf32>
    %c4_138 = arith.constant 4 : index
    %c0_139 = arith.constant 0 : index
    %c0_140 = arith.constant 0 : index
    %275 = vector.load %arg8[%c4_138, %c0_139, %c0_140] : memref<33x2x16xf32, #tpu.memory_space<vmem>>, vector<1x2x16xf32>
    %276 = vector.shape_cast %275 : vector<1x2x16xf32> to vector<2x16xf32>
    %c15 = arith.constant 15 : index
    %c0_141 = arith.constant 0 : index
    %c0_142 = arith.constant 0 : index
    %277 = vector.load %arg8[%c15, %c0_141, %c0_142] : memref<33x2x16xf32, #tpu.memory_space<vmem>>, vector<1x2x16xf32>
    %278 = vector.shape_cast %277 : vector<1x2x16xf32> to vector<2x16xf32>
    %279 = arith.subf %115, %276 : vector<2x16xf32>
    %280 = arith.mulf %279, %279 : vector<2x16xf32>
    %cst_143 = arith.constant dense<0.000000e+00> : vector<16xf32>
    %281 = vector.multi_reduction <add>, %280, %cst_143 [0] : vector<2x16xf32> to vector<16xf32>
    %282 = vector.shape_cast %281 : vector<16xf32> to vector<1x16xf32>
    %283 = vector.broadcast %282 : vector<1x16xf32> to vector<2x16xf32>
    %284 = arith.subf %283, %185 : vector<2x16xf32>
    %cst_144 = arith.constant 0.000000e+00 : f32
    %285 = vector.broadcast %cst_144 : f32 to vector<2x16xf32>
    %286 = arith.maximumf %284, %285 : vector<2x16xf32>
    %287 = arith.addf %286, %185 : vector<2x16xf32>
    %cst_145 = arith.constant 0.000000e+00 : f32
    %288 = vector.broadcast %cst_145 : f32 to vector<2x16xf32>
    %289 = arith.subf %288, %287 : vector<2x16xf32>
    %cst_146 = arith.constant 5.000000e-01 : f32
    %290 = vector.broadcast %cst_146 : f32 to vector<2x16xf32>
    %291 = arith.mulf %289, %290 : vector<2x16xf32>
    %292 = math.exp %291 : vector<2x16xf32>
    %293 = arith.subf %117, %278 : vector<2x16xf32>
    %294 = math.absf %293 : vector<2x16xf32>
    %295 = arith.mulf %292, %294 : vector<2x16xf32>
    %296 = arith.addf %274, %295 : vector<2x16xf32>
    %c5_147 = arith.constant 5 : index
    %c0_148 = arith.constant 0 : index
    %c0_149 = arith.constant 0 : index
    %297 = vector.load %arg8[%c5_147, %c0_148, %c0_149] : memref<33x2x16xf32, #tpu.memory_space<vmem>>, vector<1x2x16xf32>
    %298 = vector.shape_cast %297 : vector<1x2x16xf32> to vector<2x16xf32>
    %c16 = arith.constant 16 : index
    %c0_150 = arith.constant 0 : index
    %c0_151 = arith.constant 0 : index
    %299 = vector.load %arg8[%c16, %c0_150, %c0_151] : memref<33x2x16xf32, #tpu.memory_space<vmem>>, vector<1x2x16xf32>
    %300 = vector.shape_cast %299 : vector<1x2x16xf32> to vector<2x16xf32>
    %301 = arith.subf %115, %298 : vector<2x16xf32>
    %302 = arith.mulf %301, %301 : vector<2x16xf32>
    %cst_152 = arith.constant dense<0.000000e+00> : vector<16xf32>
    %303 = vector.multi_reduction <add>, %302, %cst_152 [0] : vector<2x16xf32> to vector<16xf32>
    %304 = vector.shape_cast %303 : vector<16xf32> to vector<1x16xf32>
    %305 = vector.broadcast %304 : vector<1x16xf32> to vector<2x16xf32>
    %306 = arith.subf %305, %185 : vector<2x16xf32>
    %cst_153 = arith.constant 0.000000e+00 : f32
    %307 = vector.broadcast %cst_153 : f32 to vector<2x16xf32>
    %308 = arith.maximumf %306, %307 : vector<2x16xf32>
    %309 = arith.addf %308, %185 : vector<2x16xf32>
    %cst_154 = arith.constant 0.000000e+00 : f32
    %310 = vector.broadcast %cst_154 : f32 to vector<2x16xf32>
    %311 = arith.subf %310, %309 : vector<2x16xf32>
    %cst_155 = arith.constant 5.000000e-01 : f32
    %312 = vector.broadcast %cst_155 : f32 to vector<2x16xf32>
    %313 = arith.mulf %311, %312 : vector<2x16xf32>
    %314 = math.exp %313 : vector<2x16xf32>
    %315 = arith.subf %117, %300 : vector<2x16xf32>
    %316 = math.absf %315 : vector<2x16xf32>
    %317 = arith.mulf %314, %316 : vector<2x16xf32>
    %318 = arith.addf %296, %317 : vector<2x16xf32>
    %c6_156 = arith.constant 6 : index
    %c0_157 = arith.constant 0 : index
    %c0_158 = arith.constant 0 : index
    %319 = vector.load %arg8[%c6_156, %c0_157, %c0_158] : memref<33x2x16xf32, #tpu.memory_space<vmem>>, vector<1x2x16xf32>
    %320 = vector.shape_cast %319 : vector<1x2x16xf32> to vector<2x16xf32>
    %c17_159 = arith.constant 17 : index
    %c0_160 = arith.constant 0 : index
    %c0_161 = arith.constant 0 : index
    %321 = vector.load %arg8[%c17_159, %c0_160, %c0_161] : memref<33x2x16xf32, #tpu.memory_space<vmem>>, vector<1x2x16xf32>
    %322 = vector.shape_cast %321 : vector<1x2x16xf32> to vector<2x16xf32>
    %323 = arith.subf %115, %320 : vector<2x16xf32>
    %324 = arith.mulf %323, %323 : vector<2x16xf32>
    %cst_162 = arith.constant dense<0.000000e+00> : vector<16xf32>
    %325 = vector.multi_reduction <add>, %324, %cst_162 [0] : vector<2x16xf32> to vector<16xf32>
    %326 = vector.shape_cast %325 : vector<16xf32> to vector<1x16xf32>
    %327 = vector.broadcast %326 : vector<1x16xf32> to vector<2x16xf32>
    %328 = arith.subf %327, %185 : vector<2x16xf32>
    %cst_163 = arith.constant 0.000000e+00 : f32
    %329 = vector.broadcast %cst_163 : f32 to vector<2x16xf32>
    %330 = arith.maximumf %328, %329 : vector<2x16xf32>
    %331 = arith.addf %330, %185 : vector<2x16xf32>
    %cst_164 = arith.constant 0.000000e+00 : f32
    %332 = vector.broadcast %cst_164 : f32 to vector<2x16xf32>
    %333 = arith.subf %332, %331 : vector<2x16xf32>
    %cst_165 = arith.constant 5.000000e-01 : f32
    %334 = vector.broadcast %cst_165 : f32 to vector<2x16xf32>
    %335 = arith.mulf %333, %334 : vector<2x16xf32>
    %336 = math.exp %335 : vector<2x16xf32>
    %337 = arith.subf %117, %322 : vector<2x16xf32>
    %338 = math.absf %337 : vector<2x16xf32>
    %339 = arith.mulf %336, %338 : vector<2x16xf32>
    %340 = arith.addf %318, %339 : vector<2x16xf32>
    %c7_166 = arith.constant 7 : index
    %c0_167 = arith.constant 0 : index
    %c0_168 = arith.constant 0 : index
    %341 = vector.load %arg8[%c7_166, %c0_167, %c0_168] : memref<33x2x16xf32, #tpu.memory_space<vmem>>, vector<1x2x16xf32>
    %342 = vector.shape_cast %341 : vector<1x2x16xf32> to vector<2x16xf32>
    %c18 = arith.constant 18 : index
    %c0_169 = arith.constant 0 : index
    %c0_170 = arith.constant 0 : index
    %343 = vector.load %arg8[%c18, %c0_169, %c0_170] : memref<33x2x16xf32, #tpu.memory_space<vmem>>, vector<1x2x16xf32>
    %344 = vector.shape_cast %343 : vector<1x2x16xf32> to vector<2x16xf32>
    %345 = arith.subf %115, %342 : vector<2x16xf32>
    %346 = arith.mulf %345, %345 : vector<2x16xf32>
    %cst_171 = arith.constant dense<0.000000e+00> : vector<16xf32>
    %347 = vector.multi_reduction <add>, %346, %cst_171 [0] : vector<2x16xf32> to vector<16xf32>
    %348 = vector.shape_cast %347 : vector<16xf32> to vector<1x16xf32>
    %349 = vector.broadcast %348 : vector<1x16xf32> to vector<2x16xf32>
    %350 = arith.subf %349, %185 : vector<2x16xf32>
    %cst_172 = arith.constant 0.000000e+00 : f32
    %351 = vector.broadcast %cst_172 : f32 to vector<2x16xf32>
    %352 = arith.maximumf %350, %351 : vector<2x16xf32>
    %353 = arith.addf %352, %185 : vector<2x16xf32>
    %cst_173 = arith.constant 0.000000e+00 : f32
    %354 = vector.broadcast %cst_173 : f32 to vector<2x16xf32>
    %355 = arith.subf %354, %353 : vector<2x16xf32>
    %cst_174 = arith.constant 5.000000e-01 : f32
    %356 = vector.broadcast %cst_174 : f32 to vector<2x16xf32>
    %357 = arith.mulf %355, %356 : vector<2x16xf32>
    %358 = math.exp %357 : vector<2x16xf32>
    %359 = arith.subf %117, %344 : vector<2x16xf32>
    %360 = math.absf %359 : vector<2x16xf32>
    %361 = arith.mulf %358, %360 : vector<2x16xf32>
    %362 = arith.addf %340, %361 : vector<2x16xf32>
    %c8_175 = arith.constant 8 : index
    %c0_176 = arith.constant 0 : index
    %c0_177 = arith.constant 0 : index
    %363 = vector.load %arg8[%c8_175, %c0_176, %c0_177] : memref<33x2x16xf32, #tpu.memory_space<vmem>>, vector<1x2x16xf32>
    %364 = vector.shape_cast %363 : vector<1x2x16xf32> to vector<2x16xf32>
    %c19 = arith.constant 19 : index
    %c0_178 = arith.constant 0 : index
    %c0_179 = arith.constant 0 : index
    %365 = vector.load %arg8[%c19, %c0_178, %c0_179] : memref<33x2x16xf32, #tpu.memory_space<vmem>>, vector<1x2x16xf32>
    %366 = vector.shape_cast %365 : vector<1x2x16xf32> to vector<2x16xf32>
    %367 = arith.subf %115, %364 : vector<2x16xf32>
    %368 = arith.mulf %367, %367 : vector<2x16xf32>
    %cst_180 = arith.constant dense<0.000000e+00> : vector<16xf32>
    %369 = vector.multi_reduction <add>, %368, %cst_180 [0] : vector<2x16xf32> to vector<16xf32>
    %370 = vector.shape_cast %369 : vector<16xf32> to vector<1x16xf32>
    %371 = vector.broadcast %370 : vector<1x16xf32> to vector<2x16xf32>
    %372 = arith.subf %371, %185 : vector<2x16xf32>
    %cst_181 = arith.constant 0.000000e+00 : f32
    %373 = vector.broadcast %cst_181 : f32 to vector<2x16xf32>
    %374 = arith.maximumf %372, %373 : vector<2x16xf32>
    %375 = arith.addf %374, %185 : vector<2x16xf32>
    %cst_182 = arith.constant 0.000000e+00 : f32
    %376 = vector.broadcast %cst_182 : f32 to vector<2x16xf32>
    %377 = arith.subf %376, %375 : vector<2x16xf32>
    %cst_183 = arith.constant 5.000000e-01 : f32
    %378 = vector.broadcast %cst_183 : f32 to vector<2x16xf32>
    %379 = arith.mulf %377, %378 : vector<2x16xf32>
    %380 = math.exp %379 : vector<2x16xf32>
    %381 = arith.subf %117, %366 : vector<2x16xf32>
    %382 = math.absf %381 : vector<2x16xf32>
    %383 = arith.mulf %380, %382 : vector<2x16xf32>
    %384 = arith.addf %362, %383 : vector<2x16xf32>
    %c9_184 = arith.constant 9 : index
    %c0_185 = arith.constant 0 : index
    %c0_186 = arith.constant 0 : index
    %385 = vector.load %arg8[%c9_184, %c0_185, %c0_186] : memref<33x2x16xf32, #tpu.memory_space<vmem>>, vector<1x2x16xf32>
    %386 = vector.shape_cast %385 : vector<1x2x16xf32> to vector<2x16xf32>
    %c20 = arith.constant 20 : index
    %c0_187 = arith.constant 0 : index
    %c0_188 = arith.constant 0 : index
    %387 = vector.load %arg8[%c20, %c0_187, %c0_188] : memref<33x2x16xf32, #tpu.memory_space<vmem>>, vector<1x2x16xf32>
    %388 = vector.shape_cast %387 : vector<1x2x16xf32> to vector<2x16xf32>
    %389 = arith.subf %115, %386 : vector<2x16xf32>
    %390 = arith.mulf %389, %389 : vector<2x16xf32>
    %cst_189 = arith.constant dense<0.000000e+00> : vector<16xf32>
    %391 = vector.multi_reduction <add>, %390, %cst_189 [0] : vector<2x16xf32> to vector<16xf32>
    %392 = vector.shape_cast %391 : vector<16xf32> to vector<1x16xf32>
    %393 = vector.broadcast %392 : vector<1x16xf32> to vector<2x16xf32>
    %394 = arith.subf %393, %185 : vector<2x16xf32>
    %cst_190 = arith.constant 0.000000e+00 : f32
    %395 = vector.broadcast %cst_190 : f32 to vector<2x16xf32>
    %396 = arith.maximumf %394, %395 : vector<2x16xf32>
    %397 = arith.addf %396, %185 : vector<2x16xf32>
    %cst_191 = arith.constant 0.000000e+00 : f32
    %398 = vector.broadcast %cst_191 : f32 to vector<2x16xf32>
    %399 = arith.subf %398, %397 : vector<2x16xf32>
    %cst_192 = arith.constant 5.000000e-01 : f32
    %400 = vector.broadcast %cst_192 : f32 to vector<2x16xf32>
    %401 = arith.mulf %399, %400 : vector<2x16xf32>
    %402 = math.exp %401 : vector<2x16xf32>
    %403 = arith.subf %117, %388 : vector<2x16xf32>
    %404 = math.absf %403 : vector<2x16xf32>
    %405 = arith.mulf %402, %404 : vector<2x16xf32>
    %406 = arith.addf %384, %405 : vector<2x16xf32>
    %c10_193 = arith.constant 10 : index
    %c0_194 = arith.constant 0 : index
    %c0_195 = arith.constant 0 : index
    %407 = vector.load %arg8[%c10_193, %c0_194, %c0_195] : memref<33x2x16xf32, #tpu.memory_space<vmem>>, vector<1x2x16xf32>
    %408 = vector.shape_cast %407 : vector<1x2x16xf32> to vector<2x16xf32>
    %c21 = arith.constant 21 : index
    %c0_196 = arith.constant 0 : index
    %c0_197 = arith.constant 0 : index
    %409 = vector.load %arg8[%c21, %c0_196, %c0_197] : memref<33x2x16xf32, #tpu.memory_space<vmem>>, vector<1x2x16xf32>
    %410 = vector.shape_cast %409 : vector<1x2x16xf32> to vector<2x16xf32>
    %411 = arith.subf %115, %408 : vector<2x16xf32>
    %412 = arith.mulf %411, %411 : vector<2x16xf32>
    %cst_198 = arith.constant dense<0.000000e+00> : vector<16xf32>
    %413 = vector.multi_reduction <add>, %412, %cst_198 [0] : vector<2x16xf32> to vector<16xf32>
    %414 = vector.shape_cast %413 : vector<16xf32> to vector<1x16xf32>
    %415 = vector.broadcast %414 : vector<1x16xf32> to vector<2x16xf32>
    %416 = arith.subf %415, %185 : vector<2x16xf32>
    %cst_199 = arith.constant 0.000000e+00 : f32
    %417 = vector.broadcast %cst_199 : f32 to vector<2x16xf32>
    %418 = arith.maximumf %416, %417 : vector<2x16xf32>
    %419 = arith.addf %418, %185 : vector<2x16xf32>
    %cst_200 = arith.constant 0.000000e+00 : f32
    %420 = vector.broadcast %cst_200 : f32 to vector<2x16xf32>
    %421 = arith.subf %420, %419 : vector<2x16xf32>
    %cst_201 = arith.constant 5.000000e-01 : f32
    %422 = vector.broadcast %cst_201 : f32 to vector<2x16xf32>
    %423 = arith.mulf %421, %422 : vector<2x16xf32>
    %424 = math.exp %423 : vector<2x16xf32>
    %425 = arith.subf %117, %410 : vector<2x16xf32>
    %426 = math.absf %425 : vector<2x16xf32>
    %427 = arith.mulf %424, %426 : vector<2x16xf32>
    %428 = arith.addf %406, %427 : vector<2x16xf32>
    %429 = vector.shape_cast %428 : vector<2x16xf32> to vector<1x2x16xf32>
    %cst_202 = arith.constant dense<0.000000e+00> : vector<1xf32>
    %430 = vector.multi_reduction <add>, %429, %cst_202 [1, 2] : vector<1x2x16xf32> to vector<1xf32>
    %431 = vector.shape_cast %430 : vector<1xf32> to vector<1x1x1xf32>
    %432 = vector.extract %431[0, 0, 0] : f32 from vector<1x1x1xf32>
    %cst_203 = arith.constant 2.000000e+00 : f32
    %433 = arith.divf %432, %cst_203 : f32
    %434 = arith.subf %115, %117 : vector<2x16xf32>
    %435 = arith.mulf %434, %434 : vector<2x16xf32>
    %cst_204 = arith.constant dense<0.000000e+00> : vector<2xf32>
    %436 = vector.multi_reduction <add>, %435, %cst_204 [1] : vector<2x16xf32> to vector<2xf32>
    %437 = vector.shape_cast %436 : vector<2xf32> to vector<2x1xf32>
    %438 = vector.shape_cast %437 : vector<2x1xf32> to vector<1x2x1xf32>
    %cst_205 = arith.constant dense<0.000000e+00> : vector<1xf32>
    %439 = vector.multi_reduction <add>, %438, %cst_205 [1, 2] : vector<1x2x1xf32> to vector<1xf32>
    %440 = vector.shape_cast %439 : vector<1xf32> to vector<1x1x1xf32>
    %441 = vector.extract %440[0, 0, 0] : f32 from vector<1x1x1xf32>
    %cst_206 = arith.constant 2.000000e+00 : f32
    %442 = arith.divf %441, %cst_206 : f32
    %cst_207 = arith.constant 1.000000e-01 : f32
    %443 = arith.mulf %cst_207, %442 : f32
    %444 = arith.addf %433, %443 : f32
    %cst_208 = arith.constant 0.00999999977 : f32
    %445 = arith.mulf %444, %cst_208 : f32
    %cst_209 = arith.constant 0.00999999977 : f32
    %446 = arith.mulf %cst_209, %88 : f32
    %447 = arith.addf %25, %446 : f32
    %448 = arith.addf %447, %445 : f32
    %cst_210 = arith.constant 5.000000e-01 : f32
    %449 = arith.mulf %cst_210, %113 : f32
    %450 = arith.addf %448, %449 : f32
    %451 = tpu.iota {dimensions = array<i32: 1>} : vector<1x128xi32>
    %c0_i32 = arith.constant 0 : i32
    %452 = vector.broadcast %c0_i32 : i32 to vector<1x128xi32>
    %453 = arith.cmpi eq, %451, %452 : vector<1x128xi32>
    %c1_i32 = arith.constant 1 : i32
    %454 = vector.broadcast %c1_i32 : i32 to vector<1x128xi32>
    %455 = arith.cmpi eq, %451, %454 : vector<1x128xi32>
    %c2_i32 = arith.constant 2 : i32
    %456 = vector.broadcast %c2_i32 : i32 to vector<1x128xi32>
    %457 = arith.cmpi eq, %451, %456 : vector<1x128xi32>
    %c3_i32 = arith.constant 3 : i32
    %458 = vector.broadcast %c3_i32 : i32 to vector<1x128xi32>
    %459 = arith.cmpi eq, %451, %458 : vector<1x128xi32>
    %c4_i32 = arith.constant 4 : i32
    %460 = vector.broadcast %c4_i32 : i32 to vector<1x128xi32>
    %461 = arith.cmpi eq, %451, %460 : vector<1x128xi32>
    %cst_211 = arith.constant 0.000000e+00 : f32
    %462 = vector.broadcast %450 : f32 to vector<1x128xf32>
    %463 = vector.broadcast %cst_211 : f32 to vector<1x128xf32>
    %464 = arith.select %461, %462, %463 : vector<1x128xi1>, vector<1x128xf32>
    %465 = vector.broadcast %113 : f32 to vector<1x128xf32>
    %466 = arith.select %459, %465, %464 : vector<1x128xi1>, vector<1x128xf32>
    %467 = vector.broadcast %445 : f32 to vector<1x128xf32>
    %468 = arith.select %457, %467, %466 : vector<1x128xi1>, vector<1x128xf32>
    %469 = vector.broadcast %88 : f32 to vector<1x128xf32>
    %470 = arith.select %455, %469, %468 : vector<1x128xi1>, vector<1x128xf32>
    %471 = vector.broadcast %25 : f32 to vector<1x128xf32>
    %472 = arith.select %453, %471, %470 : vector<1x128xi1>, vector<1x128xf32>
    %c0_212 = arith.constant 0 : index
    %c0_213 = arith.constant 0 : index
    %473 = vector.load %arg9[%c0_212, %c0_213] : memref<1x128xf32, #tpu.memory_space<vmem>>, vector<1x128xf32>
    tpu.vector_store %arg9[%c0_212, %c0_213], %472 {strides = array<i32>} : memref<1x128xf32, #tpu.memory_space<vmem>>, vector<1x128xf32>,
    return
  }
  func.func @transform_0(%arg0: i32) -> (i32, i32) {
    %c0_i32 = arith.constant 0 : i32
    %c0_i32_0 = arith.constant 0 : i32
    %c0_i32_1 = arith.constant 0 : i32
    return %c0_i32, %c0_i32_0 : i32, i32
  }
  func.func @transform_1(%arg0: i32) -> (i32, i32) {
    %c0_i32 = arith.constant 0 : i32
    %c0_i32_0 = arith.constant 0 : i32
    %c0_i32_1 = arith.constant 0 : i32
    return %c0_i32, %c0_i32_0 : i32, i32
  }
  func.func @transform_2(%arg0: i32) -> (i32, i32, i32) {
    %c0_i32 = arith.constant 0 : i32
    %c0_i32_0 = arith.constant 0 : i32
    %c0_i32_1 = arith.constant 0 : i32
    %c0_i32_2 = arith.constant 0 : i32
    return %c0_i32, %c0_i32_0, %c0_i32_1 : i32, i32, i32
  }
  func.func @transform_3(%arg0: i32) -> (i32, i32, i32) {
    %c0_i32 = arith.constant 0 : i32
    %c0_i32_0 = arith.constant 0 : i32
    %c0_i32_1 = arith.constant 0 : i32
    %c0_i32_2 = arith.constant 0 : i32
    return %c0_i32, %c0_i32_0, %c0_i32_1 : i32, i32, i32
  }
  func.func @transform_4(%arg0: i32) -> (i32, i32, i32) {
    %c0_i32 = arith.constant 0 : i32
    %c0_i32_0 = arith.constant 0 : i32
    %c0_i32_1 = arith.constant 0 : i32
    %c0_i32_2 = arith.constant 0 : i32
    return %c0_i32, %c0_i32_0, %c0_i32_1 : i32, i32, i32
  }
  func.func @transform_5(%arg0: i32) -> (i32, i32) {
    %c0_i32 = arith.constant 0 : i32
    %c0_i32_0 = arith.constant 0 : i32
    %c0_i32_1 = arith.constant 0 : i32
    return %c0_i32, %c0_i32_0 : i32, i32
  }
  func.func @transform_6(%arg0: i32) -> (i32, i32) {
    %c0_i32 = arith.constant 0 : i32
    %c0_i32_0 = arith.constant 0 : i32
    %c0_i32_1 = arith.constant 0 : i32
    return %c0_i32, %c0_i32_0 : i32, i32
  }
  func.func @transform_7(%arg0: i32) -> (i32, i32, i32) {
    %c0_i32 = arith.constant 0 : i32
    %c0_i32_0 = arith.constant 0 : i32
    %c0_i32_1 = arith.constant 0 : i32
    %c0_i32_2 = arith.constant 0 : i32
    return %c0_i32, %c0_i32_0, %c0_i32_1 : i32, i32, i32
  }
  func.func @transform_8(%arg0: i32) -> (i32, i32) {
    %c0_i32 = arith.constant 0 : i32
    %c0_i32_0 = arith.constant 0 : i32
    %c0_i32_1 = arith.constant 0 : i32
    return %c0_i32, %c0_i32_0 : i32, i32
  }
}

</mosaic_0001>

<llo_original>
// kernel: tpu_custom_call.1
$region0: #{tpu_custom_call.1}
  #allocation0 [shape = 'u32[]', space=smem, size = 0x4, offset = 0x4, fixed_abs, tag = 'smem constant byte address 0x4 - core index']
  #allocation1 [shape = 'u32[144,128]{1,0:T(1,128)}', space=vmem, size = 0x12000, scoped, tag = 'internal scratch']
  %s0 = inlined_call_operand.vmem [shape: f32[2,4], index: 0, kind: input, shape index: {}]
  %s1 = inlined_call_operand.vmem [shape: f32[2,4], index: 1, kind: input, shape index: {}]
  %s2 = inlined_call_operand.vmem [shape: f32[4,8,32], index: 2, kind: input, shape index: {}]
  %s3 = inlined_call_operand.vmem [shape: f32[4,8,32], index: 3, kind: input, shape index: {}]
  %s4 = inlined_call_operand.vmem [shape: f32[4,8,32], index: 4, kind: input, shape index: {}]
  %s5 = inlined_call_operand.vmem [shape: f32[1,6], index: 5, kind: input, shape index: {}]
  %s6 = inlined_call_operand.vmem [shape: f32[1,6], index: 6, kind: input, shape index: {}]
  %s7 = inlined_call_operand.vmem [shape: f32[33,2,16], index: 7, kind: input, shape index: {}]
  %s8 = inlined_call_operand.hbm [shape: f32[1,128], index: 8, kind: output, shape index: {}]
  %s9 = sld [smem:[#allocation0]]
  $region42: #{tpu_custom_call.1} parent=0
    _
  %s11 = ssub.s32 1, %s9
  %s12 = scalar_select 0, %s11, %s9
  $region1: #{tpu_custom_call.1} parent=0
    #allocation2 [shape = 'u8[512]{0}', space=vmem, size = 0x400, scoped, tag = 'output window, operand 0, single buffered']
    #allocation3 [shape = 's32[1]{0}', space=sflag, size = 0x4, scoped, tag = 'scoped memory for tpu_custom_call.1']
    %13 = vsyncpa [#allocation3], 0
    // Predicated region
    $region2: #{tpu_custom_call.1} parent=1 // pred_check
      _
    $region3: #{tpu_custom_call.1} parent=1 // pred_check_branch
      %15 = sbr.rel (0) target = $region5
    $region4: #{tpu_custom_call.1} parent=1 // pred_region
      _
    $region5: #{tpu_custom_call.1} parent=1 // pred_fallthru
      _
    // Predicated region
    $region6: #{tpu_custom_call.1} parent=1 // pred_check
      _
    $region7: #{tpu_custom_call.1} parent=1 // pred_check_branch
      %17 = sbr.rel (0) target = $region9
    $region8: #{tpu_custom_call.1} parent=1 // pred_region
      _
    $region9: #{tpu_custom_call.1} parent=1 // pred_fallthru
      _
    // Predicated region
    $region10: #{tpu_custom_call.1} parent=1 // pred_check
      _
    $region11: #{tpu_custom_call.1} parent=1 // pred_check_branch
      %19 = sbr.rel (0) target = $region13
    $region12: #{tpu_custom_call.1} parent=1 // pred_region
      _
    $region13: #{tpu_custom_call.1} parent=1 // pred_fallthru
      _
    // Predicated region
    $region14: #{tpu_custom_call.1} parent=1 // pred_check
      _
    $region15: #{tpu_custom_call.1} parent=1 // pred_check_branch
      %21 = sbr.rel (0) target = $region17
    $region16: #{tpu_custom_call.1} parent=1 // pred_region
      _
    $region17: #{tpu_custom_call.1} parent=1 // pred_fallthru
      _
    // Predicated region
    $region18: #{tpu_custom_call.1} parent=1 // pred_check
      _
    $region19: #{tpu_custom_call.1} parent=1 // pred_check_branch
      %23 = sbr.rel (0) target = $region21
    $region20: #{tpu_custom_call.1} parent=1 // pred_region
      _
    $region21: #{tpu_custom_call.1} parent=1 // pred_fallthru
      _
    // Predicated region
    $region22: #{tpu_custom_call.1} parent=1 // pred_check
      _
    $region23: #{tpu_custom_call.1} parent=1 // pred_check_branch
      %25 = sbr.rel (0) target = $region25
    $region24: #{tpu_custom_call.1} parent=1 // pred_region
      _
    $region25: #{tpu_custom_call.1} parent=1 // pred_fallthru
      _
    // Predicated region
    $region26: #{tpu_custom_call.1} parent=1 // pred_check
      _
    $region27: #{tpu_custom_call.1} parent=1 // pred_check_branch
      %27 = sbr.rel (0) target = $region29
    $region28: #{tpu_custom_call.1} parent=1 // pred_region
      _
    $region29: #{tpu_custom_call.1} parent=1 // pred_fallthru
      _
    // Predicated region
    $region30: #{tpu_custom_call.1} parent=1 // pred_check
      _
    $region31: #{tpu_custom_call.1} parent=1 // pred_check_branch
      %29 = sbr.rel (0) target = $region33
    $region32: #{tpu_custom_call.1} parent=1 // pred_region
      _
    $region33: #{tpu_custom_call.1} parent=1 // pred_fallthru
      _
    %v30 = vld [vmem:[%s0] sm:$0x3]
    %v31 = vld [vmem:[%s1] sm:$0x3]
    %vm32 = vcmask 25600
    %v33 = vsel %vm32, %v31, 0.0
    %34 = vadd.xlane.f32.xlu0 %v33
    %v35 = vpop.xlane.xlu0 %34
    %v36 = vrcp.pop %v35
    %v37 = vmul.f32 %v31, %v36
    %v38 = vlog2.pop %v30
    %v39 = vmul.f32 %v38, 0.6931472
    %v40 = vmax.f32 %v39, -100.0
    %v41 = vsub.f32 1.0, %v30
    %v42 = vlog2.pop %v41
    %v43 = vmul.f32 %v42, 0.6931472
    %v44 = vmax.f32 %v43, -100.0
    %v45 = vmul.f32 %v37, %v40
    %v46 = vsub.f32 1.0, %v37
    %v47 = vmul.f32 %v46, %v44
    %v48 = vadd.f32 %v45, %v47
    %v49 = vsub.f32 0.0, %v48
    %v50 = vsel %vm32, %v49, 0.0
    %51 = vadd.xlane.f32.xlu0 %v50
    %v52 = vpop.xlane.xlu0 %51
    %v53 = vrot.slane %v52, 4
    %v54 = vadd.f32 %v52, %v53
    %v55 = vrot.slane %v54, 2
    %v56 = vadd.f32 %v54, %v55
    %v57 = vrot.slane %v56, 1
    %v58 = vadd.f32 %v56, %v57
    %s59 = vtos %v58
    %v60 = vrcp.pop 8.0
    %s61 = vtos %v60
    %s62 = smul.f32 %s59, %s61
    %v63 = vld [vmem:[%s2] sm:$0xff]
    %v64 = vld [vmem:[%s2 + $0x8] sm:$0xff]
    %v65 = vld [vmem:[%s2 + $0x10] sm:$0xff]
    %v66 = vld [vmem:[%s2 + $0x18] sm:$0xff]
    %v67 = vld [vmem:[%s3] sm:$0xff]
    %v68 = vld [vmem:[%s3 + $0x8] sm:$0xff]
    %v69 = vld [vmem:[%s3 + $0x10] sm:$0xff]
    %v70 = vld [vmem:[%s3 + $0x18] sm:$0xff]
    %v71 = vld [vmem:[%s4] sm:$0xff]
    %v72 = vld [vmem:[%s4 + $0x8] sm:$0xff]
    %v73 = vld [vmem:[%s4 + $0x10] sm:$0xff]
    %v74 = vld [vmem:[%s4 + $0x18] sm:$0xff]
    %vm75 = vcmask 261120
    %v76 = vsel %vm75, %v63, 0.0
    %v77 = vrot.slane %v76, 4
    %v78 = vadd.f32 %v76, %v77
    %v79 = vrot.slane %v78, 2
    %v80 = vadd.f32 %v78, %v79
    %v81 = vrot.slane %v80, 1
    %v82 = vadd.f32 %v80, %v81
    %v83 = vsel %vm75, %v64, 0.0
    %v84 = vrot.slane %v83, 4
    %v85 = vadd.f32 %v83, %v84
    %v86 = vrot.slane %v85, 2
    %v87 = vadd.f32 %v85, %v86
    %v88 = vrot.slane %v87, 1
    %v89 = vadd.f32 %v87, %v88
    %v90 = vsel %vm75, %v65, 0.0
    %v91 = vrot.slane %v90, 4
    %v92 = vadd.f32 %v90, %v91
    %v93 = vrot.slane %v92, 2
    %v94 = vadd.f32 %v92, %v93
    %v95 = vrot.slane %v94, 1
    %v96 = vadd.f32 %v94, %v95
    %v97 = vsel %vm75, %v66, 0.0
    %v98 = vrot.slane %v97, 4
    %v99 = vadd.f32 %v97, %v98
    %v100 = vrot.slane %v99, 2
    %v101 = vadd.f32 %v99, %v100
    %v102 = vrot.slane %v101, 1
    %v103 = vadd.f32 %v101, %v102
    %v104 = vrcp.pop 8.0
    %v105 = vmul.f32 %v82, %v104
    %v106 = vmul.f32 %v89, %v104
    %v107 = vmul.f32 %v96, %v104
    %v108 = vmul.f32 %v103, %v104
    %v109 = vsel %vm75, %v67, 0.0
    %v110 = vrot.slane %v109, 4
    %v111 = vadd.f32 %v109, %v110
    %v112 = vrot.slane %v111, 2
    %v113 = vadd.f32 %v111, %v112
    %v114 = vrot.slane %v113, 1
    %v115 = vadd.f32 %v113, %v114
    %v116 = vsel %vm75, %v68, 0.0
    %v117 = vrot.slane %v116, 4
    %v118 = vadd.f32 %v116, %v117
    %v119 = vrot.slane %v118, 2
    %v120 = vadd.f32 %v118, %v119
    %v121 = vrot.slane %v120, 1
    %v122 = vadd.f32 %v120, %v121
    %v123 = vsel %vm75, %v69, 0.0
    %v124 = vrot.slane %v123, 4
    %v125 = vadd.f32 %v123, %v124
    %v126 = vrot.slane %v125, 2
    %v127 = vadd.f32 %v125, %v126
    %v128 = vrot.slane %v127, 1
    %v129 = vadd.f32 %v127, %v128
    %v130 = vsel %vm75, %v70, 0.0
    %v131 = vrot.slane %v130, 4
    %v132 = vadd.f32 %v130, %v131
    %v133 = vrot.slane %v132, 2
    %v134 = vadd.f32 %v132, %v133
    %v135 = vrot.slane %v134, 1
    %v136 = vadd.f32 %v134, %v135
    %v137 = vmul.f32 %v115, %v104
    %v138 = vmul.f32 %v122, %v104
    %v139 = vmul.f32 %v129, %v104
    %v140 = vmul.f32 %v136, %v104
    %v141 = vmul.f32 %v105, %v105
    %v142 = vmul.f32 %v106, %v106
    %v143 = vmul.f32 %v107, %v107
    %v144 = vmul.f32 %v108, %v108
    %vm149 = vcmask 1041409
    %v150 = vsel %vm149, %v142, %v141
    %vm151 = vcmask 1042434
    %v152 = vsel %vm151, %v143, %v150
    %vm153 = vcmask 1043459
    %v154 = vsel %vm153, %v144, %v152
    %vm156 = vcmask 257024
    %v157 = vsel %vm156, %v154, 0.0
    %158 = vadd.xlane.f32.xlu0 %v157
    %v159 = vpop.xlane.xlu0 %158
    %v160 = vmax.f32 %v159, 1e-24
    %v161 = vrsqrt.pop %v160
    %v163 = vrot.slane %v161, 1
    %v164 = vrot.slane %v161, 2
    %v165 = vrot.slane %v161, 3
    %v170 = vmul.f32 %v105, %v161
    %v171 = vmul.f32 %v106, %v163
    %v172 = vmul.f32 %v107, %v164
    %v173 = vmul.f32 %v108, %v165
    %v174 = vmul.f32 %v137, %v137
    %v175 = vmul.f32 %v138, %v138
    %v176 = vmul.f32 %v139, %v139
    %v177 = vmul.f32 %v140, %v140
    %v182 = vsel %vm149, %v175, %v174
    %v183 = vsel %vm151, %v176, %v182
    %v184 = vsel %vm153, %v177, %v183
    %v186 = vsel %vm156, %v184, 0.0
    %187 = vadd.xlane.f32.xlu0 %v186
    %v188 = vpop.xlane.xlu0 %187
    %v189 = vmax.f32 %v188, 1e-24
    %v190 = vrsqrt.pop %v189
    %v192 = vrot.slane %v190, 1
    %v193 = vrot.slane %v190, 2
    %v194 = vrot.slane %v190, 3
    %v199 = vmul.f32 %v137, %v190
    %v200 = vmul.f32 %v138, %v192
    %v201 = vmul.f32 %v139, %v193
    %v202 = vmul.f32 %v140, %v194
    %v203 = vmul.f32 %v71, %v71
    %v204 = vmul.f32 %v72, %v72
    %v205 = vmul.f32 %v73, %v73
    %v206 = vmul.f32 %v74, %v74
    %v207 = vsel %vm75, %v203, 0.0
    %208 = vadd.xlane.f32.xlu0 %v207
    %v209 = vpop.xlane.xlu0 %208
    %v210 = vsel %vm75, %v204, 0.0
    %211 = vadd.xlane.f32.xlu0 %v210
    %v212 = vpop.xlane.xlu0 %211
    %v213 = vsel %vm75, %v205, 0.0
    %214 = vadd.xlane.f32.xlu0 %v213
    %v215 = vpop.xlane.xlu0 %214
    %v216 = vsel %vm75, %v206, 0.0
    %217 = vadd.xlane.f32.xlu0 %v216
    %v218 = vpop.xlane.xlu0 %217
    %v219 = vmax.f32 %v209, 1e-24
    %v220 = vmax.f32 %v212, 1e-24
    %v221 = vmax.f32 %v215, 1e-24
    %v222 = vmax.f32 %v218, 1e-24
    %v223 = vrsqrt.pop %v219
    %v224 = vrsqrt.pop %v220
    %v225 = vrsqrt.pop %v221
    %v226 = vrsqrt.pop %v222
    %v227 = vmul.f32 %v71, %v223
    %v228 = vmul.f32 %v72, %v224
    %v229 = vmul.f32 %v73, %v225
    %v230 = vmul.f32 %v74, %v226
    %v231 = vmul.f32 %v170, %v199
    %v232 = vmul.f32 %v171, %v200
    %v233 = vmul.f32 %v172, %v201
    %v234 = vmul.f32 %v173, %v202
    %v239 = vrot.slane %v232, 7
    %v240 = vsel %vm149, %v239, %v231
    %v241 = vrot.slane %v233, 6
    %v242 = vsel %vm151, %v241, %v240
    %v243 = vrot.slane %v234, 5
    %v244 = vsel %vm153, %v243, %v242
    %v246 = vsel %vm156, %v244, 0.0
    %247 = vadd.xlane.f32.xlu0 %v246
    %v248 = vpop.xlane.xlu0 %247
    %v249 = vmul.f32 %v248, 14.285714
    %v250 = vlaneseq
    %v251 = vshrl.u32 %v250, 7
    %v252 = vsub.s32 0, %v251
    %v253 = vrot.slane %v170, %v252
    %v254 = vlaneseq
    %v255 = vshrl.u32 %v254, 7
    %v256 = vsub.s32 0, %v255
    %v257 = vrot.slane %v171, %v256
    %v258 = vlaneseq
    %v259 = vshrl.u32 %v258, 7
    %v260 = vsub.s32 0, %v259
    %v261 = vrot.slane %v172, %v260
    %v262 = vlaneseq
    %v263 = vshrl.u32 %v262, 7
    %v264 = vsub.s32 0, %v263
    %v265 = vrot.slane %v173, %v264
    %v266 = vmul.f32 %v253, %v227
    %v267 = vmul.f32 %v257, %v228
    %v268 = vmul.f32 %v261, %v229
    %v269 = vmul.f32 %v265, %v230
    %v270 = vsel %vm75, %v266, 0.0
    %271 = vadd.xlane.f32.xlu0 %v270
    %v272 = vpop.xlane.xlu0 %271
    %v273 = vsel %vm75, %v267, 0.0
    %274 = vadd.xlane.f32.xlu0 %v273
    %v275 = vpop.xlane.xlu0 %274
    %v276 = vsel %vm75, %v268, 0.0
    %277 = vadd.xlane.f32.xlu0 %v276
    %v278 = vpop.xlane.xlu0 %277
    %v279 = vsel %vm75, %v269, 0.0
    %280 = vadd.xlane.f32.xlu0 %v279
    %v281 = vpop.xlane.xlu0 %280
    %v282 = vmul.f32 %v272, 14.285714
    %v283 = vmul.f32 %v275, 14.285714
    %v284 = vmul.f32 %v278, 14.285714
    %v285 = vmul.f32 %v281, 14.285714
    %v290 = vlaneseq
    %v291 = vand.u32 %v290, 127
    %v292 = vlaneseq
    %v293 = vshrl.u32 %v292, 7
    %v294 = vsub.s32 %v291, %v293
    %v295 = vrot.slane %v282, %v294
    %v296 = vlaneseq
    %v297 = vshrl.u32 %v296, 7
    %v298 = vsub.s32 %v291, %v297
    %v299 = vrot.slane %v283, %v298
    %v300 = vlaneseq
    %v301 = vshrl.u32 %v300, 7
    %v302 = vsub.s32 %v291, %v301
    %v303 = vrot.slane %v284, %v302
    %v304 = vlaneseq
    %v305 = vshrl.u32 %v304, 7
    %v306 = vsub.s32 %v291, %v305
    %v307 = vrot.slane %v285, %v306
    %v308 = vsel %vm149, %v299, %v295
    %v309 = vsel %vm151, %v303, %v308
    %v310 = vsel %vm153, %v307, %v309
    %vm312 = vcmask 60416
    %v313 = vsel %vm312, %v310, -inf
    %314 = vmax.xlane.f32.xlu0 %v313
    %v315 = vpop.xlane.xlu0 %314
    %v316 = vmax.f32 %v315, %v249
    %v317 = vsub.f32 %v249, %v316
    %v318 = vmul.f32 %v317, 1.442695
    %v319 = vpow.pop %v318
    %v321 = vlaneseq
    %v322 = vshrl.u32 %v321, 7
    %v323 = vsub.s32 0, %v322
    %v324 = vrot.slane %v316, %v323
    %v325 = vlaneseq
    %v326 = vshrl.u32 %v325, 7
    %v327 = vsub.s32 1, %v326
    %v328 = vrot.slane %v316, %v327
    %v329 = vlaneseq
    %v330 = vshrl.u32 %v329, 7
    %v331 = vsub.s32 2, %v330
    %v332 = vrot.slane %v316, %v331
    %v333 = vlaneseq
    %v334 = vshrl.u32 %v333, 7
    %v335 = vsub.s32 3, %v334
    %v336 = vrot.slane %v316, %v335
    %v341 = vsub.f32 %v282, %v324
    %v342 = vsub.f32 %v283, %v328
    %v343 = vsub.f32 %v284, %v332
    %v344 = vsub.f32 %v285, %v336
    %v345 = vmul.f32 %v341, 1.442695
    %v346 = vpow.pop %v345
    %v347 = vmul.f32 %v342, 1.442695
    %v348 = vpow.pop %v347
    %v349 = vmul.f32 %v343, 1.442695
    %v350 = vpow.pop %v349
    %v351 = vmul.f32 %v344, 1.442695
    %v352 = vpow.pop %v351
    %357 = vset.pattern.permute.xlu0 0
    %358 = vperm.xlu0 %357, %v346
    %v359 = vpop.permute.xlu0 %358
    %360 = vset.pattern.permute.xlu0 0
    %361 = vperm.xlu0 %360, %v348
    %v362 = vpop.permute.xlu0 %361
    %363 = vset.pattern.permute.xlu0 0
    %364 = vperm.xlu0 %363, %v350
    %v365 = vpop.permute.xlu0 %364
    %366 = vset.pattern.permute.xlu0 0
    %367 = vperm.xlu0 %366, %v352
    %v368 = vpop.permute.xlu0 %367
    %v369 = vlaneseq
    %v370 = vshrl.u32 %v369, 7
    %v371 = vsub.s32 %v291, %v370
    %v372 = vrot.slane %v359, %v371
    %v373 = vlaneseq
    %v374 = vshrl.u32 %v373, 7
    %v375 = vsub.s32 %v291, %v374
    %v376 = vrot.slane %v362, %v375
    %v377 = vlaneseq
    %v378 = vshrl.u32 %v377, 7
    %v379 = vsub.s32 %v291, %v378
    %v380 = vrot.slane %v365, %v379
    %v381 = vlaneseq
    %v382 = vshrl.u32 %v381, 7
    %v383 = vsub.s32 %v291, %v382
    %v384 = vrot.slane %v368, %v383
    %v385 = vsel %vm149, %v376, %v372
    %v386 = vsel %vm151, %v380, %v385
    %v387 = vsel %vm153, %v384, %v386
    %v389 = vsel %vm312, %v387, 0.0
    %390 = vadd.xlane.f32.xlu0 %v389
    %v391 = vpop.xlane.xlu0 %390
    %v392 = vadd.f32 %v319, %v391
    %v393 = vlog2.pop %v392
    %v394 = vmul.f32 %v393, 0.6931472
    %v395 = vadd.f32 %v394, %v316
    %v396 = vsub.f32 %v395, %v249
    %vm397 = vcmask 3072
    %v398 = vsel %vm397, %v396, 0.0
    %399 = vadd.xlane.f32.xlu0 %v398
    %v400 = vpop.xlane.xlu0 %399
    %v401 = vrot.slane %v400, 4
    %v402 = vadd.f32 %v400, %v401
    %v403 = vrot.slane %v402, 2
    %v404 = vadd.f32 %v402, %v403
    %v405 = vrot.slane %v404, 1
    %v406 = vadd.f32 %v404, %v405
    %s407 = vtos %v406
    %v408 = vrcp.pop 2.0
    %s409 = vtos %v408
    %s410 = smul.f32 %s407, %s409
    %v411 = vld [vmem:[%s5] sm:$0x1]
    %v412 = vld [vmem:[%s6] sm:$0x1]
    %v413 = vlog2.pop %v411
    %v414 = vmul.f32 %v413, 0.6931472
    %v415 = vmax.f32 %v414, -100.0
    %v416 = vsub.f32 0.0, %v415
    %vm417 = vcmask 40960
    %v418 = vsel %vm417, %v416, 0.0
    %419 = vadd.xlane.f32.xlu0 %v418
    %v420 = vpop.xlane.xlu0 %419
    %v421 = vrot.slane %v420, 4
    %v422 = vadd.f32 %v420, %v421
    %v423 = vrot.slane %v422, 2
    %v424 = vadd.f32 %v422, %v423
    %v425 = vrot.slane %v424, 1
    %v426 = vadd.f32 %v424, %v425
    %s427 = vtos %v426
    %v428 = vrcp.pop 6.0
    %s429 = vtos %v428
    %s430 = smul.f32 %s427, %s429
    %v431 = vsub.f32 1.0, %v412
    %v432 = vlog2.pop %v431
    %v433 = vmul.f32 %v432, 0.6931472
    %v434 = vmax.f32 %v433, -100.0
    %v435 = vsub.f32 0.0, %v434
    %v436 = vsel %vm417, %v435, 0.0
    %437 = vadd.xlane.f32.xlu0 %v436
    %v438 = vpop.xlane.xlu0 %437
    %v439 = vrot.slane %v438, 4
    %v440 = vadd.f32 %v438, %v439
    %v441 = vrot.slane %v440, 2
    %v442 = vadd.f32 %v440, %v441
    %v443 = vrot.slane %v442, 1
    %v444 = vadd.f32 %v442, %v443
    %s445 = vtos %v444
    %v446 = vrcp.pop 6.0
    %s447 = vtos %v446
    %s448 = smul.f32 %s445, %s447
    %s449 = sadd.f32 %s430, %s448
    %s450 = scalar_lea.vmem %s7, 12
    %v451 = vld [vmem:[%s450] sm:$0x3]
    %s452 = scalar_lea.vmem %s7, 34
    %v453 = vld [vmem:[%s452] sm:$0x3]
    %s454 = scalar_lea.vmem %s7, 44
    %v455 = vld [vmem:[%s454] sm:$0x3]
    %v456 = vld [vmem:[%s7] sm:$0x3]
    %v457 = vsub.f32 %v455, %v456
    %s458 = scalar_lea.vmem %s7, 46
    %v459 = vld [vmem:[%s458] sm:$0x3]
    %s460 = scalar_lea.vmem %s7, 2
    %v461 = vld [vmem:[%s460] sm:$0x3]
    %v462 = vsub.f32 %v459, %v461
    %v463 = vmax.f32 %v457, %v462
    %s464 = scalar_lea.vmem %s7, 48
    %v465 = vld [vmem:[%s464] sm:$0x3]
    %s466 = scalar_lea.vmem %s7, 4
    %v467 = vld [vmem:[%s466] sm:$0x3]
    %v468 = vsub.f32 %v465, %v467
    %v469 = vmax.f32 %v463, %v468
    %s470 = scalar_lea.vmem %s7, 50
    %v471 = vld [vmem:[%s470] sm:$0x3]
    %s472 = scalar_lea.vmem %s7, 6
    %v473 = vld [vmem:[%s472] sm:$0x3]
    %v474 = vsub.f32 %v471, %v473
    %v475 = vmax.f32 %v469, %v474
    %s476 = scalar_lea.vmem %s7, 52
    %v477 = vld [vmem:[%s476] sm:$0x3]
    %s478 = scalar_lea.vmem %s7, 8
    %v479 = vld [vmem:[%s478] sm:$0x3]
    %v480 = vsub.f32 %v477, %v479
    %v481 = vmax.f32 %v475, %v480
    %s482 = scalar_lea.vmem %s7, 54
    %v483 = vld [vmem:[%s482] sm:$0x3]
    %s484 = scalar_lea.vmem %s7, 10
    %v485 = vld [vmem:[%s484] sm:$0x3]
    %v486 = vsub.f32 %v483, %v485
    %v487 = vmax.f32 %v481, %v486
    %s488 = scalar_lea.vmem %s7, 56
    %v489 = vld [vmem:[%s488] sm:$0x3]
    %v490 = vsub.f32 %v489, %v451
    %v491 = vmax.f32 %v487, %v490
    %s492 = scalar_lea.vmem %s7, 58
    %v493 = vld [vmem:[%s492] sm:$0x3]
    %s494 = scalar_lea.vmem %s7, 14
    %v495 = vld [vmem:[%s494] sm:$0x3]
    %v496 = vsub.f32 %v493, %v495
    %v497 = vmax.f32 %v491, %v496
    %s498 = scalar_lea.vmem %s7, 60
    %v499 = vld [vmem:[%s498] sm:$0x3]
    %s500 = scalar_lea.vmem %s7, 16
    %v501 = vld [vmem:[%s500] sm:$0x3]
    %v502 = vsub.f32 %v499, %v501
    %v503 = vmax.f32 %v497, %v502
    %s504 = scalar_lea.vmem %s7, 62
    %v505 = vld [vmem:[%s504] sm:$0x3]
    %s506 = scalar_lea.vmem %s7, 18
    %v507 = vld [vmem:[%s506] sm:$0x3]
    %v508 = vsub.f32 %v505, %v507
    %v509 = vmax.f32 %v503, %v508
    %s510 = scalar_lea.vmem %s7, 64
    %v511 = vld [vmem:[%s510] sm:$0x3]
    %s512 = scalar_lea.vmem %s7, 20
    %v513 = vld [vmem:[%s512] sm:$0x3]
    %v514 = vsub.f32 %v511, %v513
    %v515 = vmax.f32 %v509, %v514
    %v516 = vmul.f32 %v515, 0.5
    %v517 = vmul.f32 %v516, %v515
    %s518 = scalar_lea.vmem %s7, 22
    %v519 = vld [vmem:[%s518] sm:$0x3]
    %v520 = vsub.f32 %v451, %v456
    %v521 = vmul.f32 %v520, %v520
    %vm522 = vcmask 123904
    %v523 = vsel %vm522, %v521, 0.0
    %v524 = vrot.slane %v523, 4
    %v525 = vadd.f32 %v523, %v524
    %v526 = vrot.slane %v525, 2
    %v527 = vadd.f32 %v525, %v526
    %v528 = vrot.slane %v527, 1
    %v529 = vadd.f32 %v527, %v528
    %v530 = vsub.f32 %v529, %v517
    %v531 = vmax.f32 %v530, 0.0
    %v532 = vadd.f32 %v531, %v517
    %v533 = vsub.f32 0.0, %v532
    %v534 = vmul.f32 %v533, 0.5
    %v535 = vmul.f32 %v534, 1.442695
    %v536 = vpow.pop %v535
    %v537 = vsub.f32 %v453, %v519
    %v538 = vand.u32 2147483647, %v537
    %v539 = vmul.f32 %v536, %v538
    %v540 = vadd.f32 %v539, 0.0
    %s541 = scalar_lea.vmem %s7, 24
    %v542 = vld [vmem:[%s541] sm:$0x3]
    %v543 = vsub.f32 %v451, %v461
    %v544 = vmul.f32 %v543, %v543
    %v545 = vsel %vm522, %v544, 0.0
    %v546 = vrot.slane %v545, 4
    %v547 = vadd.f32 %v545, %v546
    %v548 = vrot.slane %v547, 2
    %v549 = vadd.f32 %v547, %v548
    %v550 = vrot.slane %v549, 1
    %v551 = vadd.f32 %v549, %v550
    %v552 = vsub.f32 %v551, %v517
    %v553 = vmax.f32 %v552, 0.0
    %v554 = vadd.f32 %v553, %v517
    %v555 = vsub.f32 0.0, %v554
    %v556 = vmul.f32 %v555, 0.5
    %v557 = vmul.f32 %v556, 1.442695
    %v558 = vpow.pop %v557
    %v559 = vsub.f32 %v453, %v542
    %v560 = vand.u32 2147483647, %v559
    %v561 = vmul.f32 %v558, %v560
    %v562 = vadd.f32 %v540, %v561
    %s563 = scalar_lea.vmem %s7, 26
    %v564 = vld [vmem:[%s563] sm:$0x3]
    %v565 = vsub.f32 %v451, %v467
    %v566 = vmul.f32 %v565, %v565
    %v567 = vsel %vm522, %v566, 0.0
    %v568 = vrot.slane %v567, 4
    %v569 = vadd.f32 %v567, %v568
    %v570 = vrot.slane %v569, 2
    %v571 = vadd.f32 %v569, %v570
    %v572 = vrot.slane %v571, 1
    %v573 = vadd.f32 %v571, %v572
    %v574 = vsub.f32 %v573, %v517
    %v575 = vmax.f32 %v574, 0.0
    %v576 = vadd.f32 %v575, %v517
    %v577 = vsub.f32 0.0, %v576
    %v578 = vmul.f32 %v577, 0.5
    %v579 = vmul.f32 %v578, 1.442695
    %v580 = vpow.pop %v579
    %v581 = vsub.f32 %v453, %v564
    %v582 = vand.u32 2147483647, %v581
    %v583 = vmul.f32 %v580, %v582
    %v584 = vadd.f32 %v562, %v583
    %s585 = scalar_lea.vmem %s7, 28
    %v586 = vld [vmem:[%s585] sm:$0x3]
    %v587 = vsub.f32 %v451, %v473
    %v588 = vmul.f32 %v587, %v587
    %v589 = vsel %vm522, %v588, 0.0
    %v590 = vrot.slane %v589, 4
    %v591 = vadd.f32 %v589, %v590
    %v592 = vrot.slane %v591, 2
    %v593 = vadd.f32 %v591, %v592
    %v594 = vrot.slane %v593, 1
    %v595 = vadd.f32 %v593, %v594
    %v596 = vsub.f32 %v595, %v517
    %v597 = vmax.f32 %v596, 0.0
    %v598 = vadd.f32 %v597, %v517
    %v599 = vsub.f32 0.0, %v598
    %v600 = vmul.f32 %v599, 0.5
    %v601 = vmul.f32 %v600, 1.442695
    %v602 = vpow.pop %v601
    %v603 = vsub.f32 %v453, %v586
    %v604 = vand.u32 2147483647, %v603
    %v605 = vmul.f32 %v602, %v604
    %v606 = vadd.f32 %v584, %v605
    %s607 = scalar_lea.vmem %s7, 30
    %v608 = vld [vmem:[%s607] sm:$0x3]
    %v609 = vsub.f32 %v451, %v479
    %v610 = vmul.f32 %v609, %v609
    %v611 = vsel %vm522, %v610, 0.0
    %v612 = vrot.slane %v611, 4
    %v613 = vadd.f32 %v611, %v612
    %v614 = vrot.slane %v613, 2
    %v615 = vadd.f32 %v613, %v614
    %v616 = vrot.slane %v615, 1
    %v617 = vadd.f32 %v615, %v616
    %v618 = vsub.f32 %v617, %v517
    %v619 = vmax.f32 %v618, 0.0
    %v620 = vadd.f32 %v619, %v517
    %v621 = vsub.f32 0.0, %v620
    %v622 = vmul.f32 %v621, 0.5
    %v623 = vmul.f32 %v622, 1.442695
    %v624 = vpow.pop %v623
    %v625 = vsub.f32 %v453, %v608
    %v626 = vand.u32 2147483647, %v625
    %v627 = vmul.f32 %v624, %v626
    %v628 = vadd.f32 %v606, %v627
    %s629 = scalar_lea.vmem %s7, 32
    %v630 = vld [vmem:[%s629] sm:$0x3]
    %v631 = vsub.f32 %v451, %v485
    %v632 = vmul.f32 %v631, %v631
    %v633 = vsel %vm522, %v632, 0.0
    %v634 = vrot.slane %v633, 4
    %v635 = vadd.f32 %v633, %v634
    %v636 = vrot.slane %v635, 2
    %v637 = vadd.f32 %v635, %v636
    %v638 = vrot.slane %v637, 1
    %v639 = vadd.f32 %v637, %v638
    %v640 = vsub.f32 %v639, %v517
    %v641 = vmax.f32 %v640, 0.0
    %v642 = vadd.f32 %v641, %v517
    %v643 = vsub.f32 0.0, %v642
    %v644 = vmul.f32 %v643, 0.5
    %v645 = vmul.f32 %v644, 1.442695
    %v646 = vpow.pop %v645
    %v647 = vsub.f32 %v453, %v630
    %v648 = vand.u32 2147483647, %v647
    %v649 = vmul.f32 %v646, %v648
    %v650 = vadd.f32 %v628, %v649
    %v651 = vsub.f32 %v451, %v451
    %v652 = vmul.f32 %v651, %v651
    %v653 = vsel %vm522, %v652, 0.0
    %v654 = vrot.slane %v653, 4
    %v655 = vadd.f32 %v653, %v654
    %v656 = vrot.slane %v655, 2
    %v657 = vadd.f32 %v655, %v656
    %v658 = vrot.slane %v657, 1
    %v659 = vadd.f32 %v657, %v658
    %v660 = vsub.f32 %v659, %v517
    %v661 = vmax.f32 %v660, 0.0
    %v662 = vadd.f32 %v661, %v517
    %v663 = vsub.f32 0.0, %v662
    %v664 = vmul.f32 %v663, 0.5
    %v665 = vmul.f32 %v664, 1.442695
    %v666 = vpow.pop %v665
    %v667 = vsub.f32 %v453, %v453
    %v668 = vand.u32 2147483647, %v667
    %v669 = vmul.f32 %v666, %v668
    %v670 = vadd.f32 %v650, %v669
    %s671 = scalar_lea.vmem %s7, 36
    %v672 = vld [vmem:[%s671] sm:$0x3]
    %v673 = vsub.f32 %v451, %v495
    %v674 = vmul.f32 %v673, %v673
    %v675 = vsel %vm522, %v674, 0.0
    %v676 = vrot.slane %v675, 4
    %v677 = vadd.f32 %v675, %v676
    %v678 = vrot.slane %v677, 2
    %v679 = vadd.f32 %v677, %v678
    %v680 = vrot.slane %v679, 1
    %v681 = vadd.f32 %v679, %v680
    %v682 = vsub.f32 %v681, %v517
    %v683 = vmax.f32 %v682, 0.0
    %v684 = vadd.f32 %v683, %v517
    %v685 = vsub.f32 0.0, %v684
    %v686 = vmul.f32 %v685, 0.5
    %v687 = vmul.f32 %v686, 1.442695
    %v688 = vpow.pop %v687
    %v689 = vsub.f32 %v453, %v672
    %v690 = vand.u32 2147483647, %v689
    %v691 = vmul.f32 %v688, %v690
    %v692 = vadd.f32 %v670, %v691
    %s693 = scalar_lea.vmem %s7, 38
    %v694 = vld [vmem:[%s693] sm:$0x3]
    %v695 = vsub.f32 %v451, %v501
    %v696 = vmul.f32 %v695, %v695
    %v697 = vsel %vm522, %v696, 0.0
    %v698 = vrot.slane %v697, 4
    %v699 = vadd.f32 %v697, %v698
    %v700 = vrot.slane %v699, 2
    %v701 = vadd.f32 %v699, %v700
    %v702 = vrot.slane %v701, 1
    %v703 = vadd.f32 %v701, %v702
    %v704 = vsub.f32 %v703, %v517
    %v705 = vmax.f32 %v704, 0.0
    %v706 = vadd.f32 %v705, %v517
    %v707 = vsub.f32 0.0, %v706
    %v708 = vmul.f32 %v707, 0.5
    %v709 = vmul.f32 %v708, 1.442695
    %v710 = vpow.pop %v709
    %v711 = vsub.f32 %v453, %v694
    %v712 = vand.u32 2147483647, %v711
    %v713 = vmul.f32 %v710, %v712
    %v714 = vadd.f32 %v692, %v713
    %s715 = scalar_lea.vmem %s7, 40
    %v716 = vld [vmem:[%s715] sm:$0x3]
    %v717 = vsub.f32 %v451, %v507
    %v718 = vmul.f32 %v717, %v717
    %v719 = vsel %vm522, %v718, 0.0
    %v720 = vrot.slane %v719, 4
    %v721 = vadd.f32 %v719, %v720
    %v722 = vrot.slane %v721, 2
    %v723 = vadd.f32 %v721, %v722
    %v724 = vrot.slane %v723, 1
    %v725 = vadd.f32 %v723, %v724
    %v726 = vsub.f32 %v725, %v517
    %v727 = vmax.f32 %v726, 0.0
    %v728 = vadd.f32 %v727, %v517
    %v729 = vsub.f32 0.0, %v728
    %v730 = vmul.f32 %v729, 0.5
    %v731 = vmul.f32 %v730, 1.442695
    %v732 = vpow.pop %v731
    %v733 = vsub.f32 %v453, %v716
    %v734 = vand.u32 2147483647, %v733
    %v735 = vmul.f32 %v732, %v734
    %v736 = vadd.f32 %v714, %v735
    %s737 = scalar_lea.vmem %s7, 42
    %v738 = vld [vmem:[%s737] sm:$0x3]
    %v739 = vsub.f32 %v451, %v513
    %v740 = vmul.f32 %v739, %v739
    %v741 = vsel %vm522, %v740, 0.0
    %v742 = vrot.slane %v741, 4
    %v743 = vadd.f32 %v741, %v742
    %v744 = vrot.slane %v743, 2
    %v745 = vadd.f32 %v743, %v744
    %v746 = vrot.slane %v745, 1
    %v747 = vadd.f32 %v745, %v746
    %v748 = vsub.f32 %v747, %v517
    %v749 = vmax.f32 %v748, 0.0
    %v750 = vadd.f32 %v749, %v517
    %v751 = vsub.f32 0.0, %v750
    %v752 = vmul.f32 %v751, 0.5
    %v753 = vmul.f32 %v752, 1.442695
    %v754 = vpow.pop %v753
    %v755 = vsub.f32 %v453, %v738
    %v756 = vand.u32 2147483647, %v755
    %v757 = vmul.f32 %v754, %v756
    %v758 = vadd.f32 %v736, %v757
    %v759 = vsel %vm522, %v758, 0.0
    %760 = vadd.xlane.f32.xlu0 %v759
    %v761 = vpop.xlane.xlu0 %760
    %v762 = vrot.slane %v761, 4
    %v763 = vadd.f32 %v761, %v762
    %v764 = vrot.slane %v763, 2
    %v765 = vadd.f32 %v763, %v764
    %v766 = vrot.slane %v765, 1
    %v767 = vadd.f32 %v765, %v766
    %s768 = vtos %v767
    %v769 = vrcp.pop 2.0
    %s770 = vtos %v769
    %s771 = smul.f32 %s768, %s770
    %v772 = vsub.f32 %v451, %v453
    %v773 = vmul.f32 %v772, %v772
    %v774 = vsel %vm522, %v773, 0.0
    %775 = vadd.xlane.f32.xlu0 %v774
    %v776 = vpop.xlane.xlu0 %775
    %vm777 = vcmask 1024
    %v778 = vsel %vm777, %v776, 0.0
    %779 = vadd.xlane.f32.xlu0 %v778
    %v780 = vpop.xlane.xlu0 %779
    %v781 = vrot.slane %v780, 4
    %v782 = vadd.f32 %v780, %v781
    %v783 = vrot.slane %v782, 2
    %v784 = vadd.f32 %v782, %v783
    %v785 = vrot.slane %v784, 1
    %v786 = vadd.f32 %v784, %v785
    %s787 = vtos %v786
    %v788 = vrcp.pop 2.0
    %s789 = vtos %v788
    %s790 = smul.f32 %s787, %s789
    %s791 = smul.f32 %s790, 0.1
    %s792 = sadd.f32 %s771, %s791
    %s793 = smul.f32 %s792, 0.01
    %s794 = smul.f32 %s410, 0.01
    %s795 = sadd.f32 %s62, %s794
    %s796 = sadd.f32 %s795, %s793
    %s797 = smul.f32 %s449, 0.5
    %s798 = sadd.f32 %s796, %s797
    %vm799 = vcmp.eq.s32.totalorder %v291, 0
    %vm800 = vcmp.eq.s32.totalorder %v291, 1
    %vm801 = vcmp.eq.s32.totalorder %v291, 2
    %vm802 = vcmp.eq.s32.totalorder %v291, 3
    %vm803 = vcmp.eq.s32.totalorder %v291, 4
    %v804 = vstv %s798
    %v805 = vsel %vm803, %v804, 0.0
    %v806 = vstv %s449
    %v807 = vsel %vm802, %v806, %v805
    %v808 = vstv %s793
    %v809 = vsel %vm801, %v808, %v807
    %v810 = vstv %s410
    %v811 = vsel %vm800, %v810, %v809
    %v812 = vstv %s62
    %v813 = vsel %vm799, %v812, %v811
    %814 = vst [vmem:[#allocation2] sm:$0x1] %v813
    // Predicated region
    $region34: #{tpu_custom_call.1} parent=1 // pred_check
      _
    $region35: #{tpu_custom_call.1} parent=1 // pred_check_branch
      %816 = sbr.rel (0) target = $region37
    $region36: #{tpu_custom_call.1} parent=1 // pred_region
      %s818 = ssub.s32 16, 16
      %819 = vsyncadd [#allocation3], %s818
      %s821 = sshll.u32 [#allocation2], 4
      %s822 = int_to_ptr.vmem [resolvable:$true] %s821
      %824 = dma.vmem_to_hbm [thread:$0]  %s822, 16, %s8, [#allocation3]
    $region37: #{tpu_custom_call.1} parent=1 // pred_fallthru
      _
    // Predicated region
    $region38: #{tpu_custom_call.1} parent=1 // pred_check
      _
    $region39: #{tpu_custom_call.1} parent=1 // pred_check_branch
      %826 = sbr.rel (0) target = $region41
    $region40: #{tpu_custom_call.1} parent=1 // pred_region
      %827 = dma.done [#allocation3], 16
    $region41: #{tpu_custom_call.1} parent=1 // pred_fallthru
      _
    %828 = vsyncpa [#allocation3], 1

</llo_original>
